<compile_context>
chip_gen: v5e
topology: v5e:2x2
jax: 0.10.0
libtpu: 0.0.40
codegen_flags: <defaults>
</compile_context>

<pallas_src>
import functools
import string

import jax
import jax.numpy as jnp
from jax import lax
from jax.experimental import pallas as pl
from jax.experimental.pallas import tpu as pltpu

# ---- module hyper-parameters (from the PyTorch source) -----------------------
all_letters = string.ascii_letters + " .,;'"
N_LETTERS = len(all_letters)      # 57  -> input_size
N_HIDDEN = 128                    # hidden_size
N_CATEGORIES = 18                 # output_size (classic char-RNN tutorial value)

LANE = 128
SUBLANE = 8
BF16_SUBLANE = 16                 # bf16 vregs pack (16, 128)
T_CHUNK = 256                     # per-chunk steps; sized for v5e's 16 MiB scoped VMEM
UNROLL = 8                        # inner-loop unroll (hides softmax under MXU)


def _round_up(x, m):
    return (x + m - 1) // m * m


# ------------------------------ kernel ---------------------------------------
def rnn_chunk_kernel(x_ref, h0_ref, wx_ref, wh_ref, b_ref,
                     out_ref, hout_ref, h_scratch, xproj_ref,
                     *, hidden_size, chunk, b_pad, seq_len, unroll):
    """One grid step == one chunk of `chunk` RNN time steps.

    x_ref    : (chunk*b_pad, Ip)   bf16   chunk of inputs, rows grouped per step
    h0_ref   : (b_pad, H)          f32    initial hidden state (read at chunk 0)
    wx_ref   : (Ip, H + Op)        bf16   fused [i2h | i2o] input-part weights
    wh_ref   : (H,  H + Op)        bf16   fused [i2h | i2o] hidden-part weights
    b_ref    : (1,  H + Op)        f32    fused biases; padded logit lanes = -1e30
    out_ref  : (chunk*b_pad, Op)   f32    per-step log_softmax outputs
    hout_ref : (b_pad, H)          f32    final hidden state
    h_scratch: (b_pad, H)   VMEM   f32    recurrent state carried across chunks
    xproj_ref: (chunk*b_pad, H+Op) VMEM f32  hoisted input projection
    """
    c = pl.program_id(0)

    @pl.when(c == 0)
    def _():
        h_scratch[...] = h0_ref[...]

    # --- hoisted, non-recurrent input projection for the whole chunk ----------
    # One high-utilization matmul with M = chunk * b_pad; bias folded in here so
    # the serial loop below does no per-step broadcast-add.
    xproj_ref[...] = (
        jnp.dot(x_ref[...], wx_ref[...], preferred_element_type=jnp.float32)
        + b_ref[...])

    wh = wh_ref[...]  # bf16 (H, H+Op); stays VMEM/vreg-resident for the chunk

    # --- serial recurrence over the chunk --------------------------------------
    def step(t, h):
        row0 = pl.multiple_of(t * b_pad, b_pad)
        y = (xproj_ref[pl.ds(row0, b_pad), :]
             + jnp.dot(h.astype(jnp.bfloat16), wh,
                       preferred_element_type=jnp.float32))   # (b_pad, H+Op) f32

        new_h = y[:, :hidden_size]          # (b_pad, H)  clean 128-lane slice
        logits = y[:, hidden_size:]         # (b_pad, Op) padded lanes ~ -1e30

        # Numerically stable log_softmax over the lane axis; padded lanes carry
        # -1e30 so exp() underflows to 0 and they do not perturb max / logsumexp.
        m = jnp.max(logits, axis=1, keepdims=True)
        shifted = logits - m
        lse = jnp.log(jnp.sum(jnp.exp(shifted), axis=1, keepdims=True))
        out_ref[pl.ds(row0, b_pad), :] = shifted - lse

        # Do not advance the hidden state on padded tail steps (t_global >= T).
        t_global = c * chunk + t
        return jnp.where(t_global < seq_len, new_h, h)

    h_final = lax.fori_loop(0, chunk, step, h_scratch[...], unroll=unroll)
    h_scratch[...] = h_final
    hout_ref[...] = h_final      # constant-index output => written back once


# --------------------------- parameter prep (one-time) ------------------------
def prepare_params(w_i2h, b_i2h, w_i2o, b_i2o,
                   input_size, hidden_size, output_size):
    """Split the concatenated-input Linear weights, transpose to (in, out),
    fuse i2h/i2o along the output axis, pad to TPU-friendly shapes and cast the
    matmul weights to bf16. Done ONCE, out of the forward path."""
    i_pad = _round_up(input_size, SUBLANE)          # 57 -> 64
    o_pad = _round_up(output_size, LANE)            # 18 -> 128
    n_fused = hidden_size + o_pad                   # 128 + 128 = 256

    wih_x = w_i2h[:, :input_size].T                 # (I, H)
    wih_h = w_i2h[:, input_size:].T                 # (H, H)
    wio_x = w_i2o[:, :input_size].T                 # (I, O)
    wio_h = w_i2o[:, input_size:].T                 # (H, O)

    wx = jnp.zeros((i_pad, n_fused), jnp.float32)
    wx = wx.at[:input_size, :hidden_size].set(wih_x)
    wx = wx.at[:input_size, hidden_size:hidden_size + output_size].set(wio_x)

    wh = jnp.zeros((hidden_size, n_fused), jnp.float32)
    wh = wh.at[:, :hidden_size].set(wih_h)
    wh = wh.at[:, hidden_size:hidden_size + output_size].set(wio_h)

    # Real biases in f32; padded logit lanes get -1e30 so log_softmax ignores
    # them (safe in f32/bf16; would overflow only if ever cast to fp16).
    bias = jnp.full((1, n_fused), -1e30, jnp.float32)
    bias = bias.at[0, :hidden_size].set(b_i2h)
    bias = bias.at[0, hidden_size:hidden_size + output_size].set(b_i2o)

    return wx.astype(jnp.bfloat16), wh.astype(jnp.bfloat16), bias


# ------------------------------- forward --------------------------------------
@functools.partial(jax.jit, static_argnames=("input_size", "hidden_size",
                                              "output_size", "t_chunk"))
def rnn_sequence(x_seq, h0, wx, wh, bias, *,
                 input_size, hidden_size, output_size, t_chunk=T_CHUNK):
    """Run the RNN cell over a whole sequence in ONE pallas_call.

    x_seq: (T, B, input_size), h0: (B, hidden_size)
    returns (out_seq: (T, B, output_size) log-probs, h_final: (B, hidden_size))
    A T=1 call reproduces the original module's single-step forward exactly.
    """
    T, B, _ = x_seq.shape
    i_pad, n_fused = wx.shape
    o_pad = n_fused - hidden_size
    b_pad = max(_round_up(B, BF16_SUBLANE), BF16_SUBLANE)

    chunk = min(t_chunk, _round_up(T, SUBLANE))
    t_pad = _round_up(T, chunk)
    n_chunks = t_pad // chunk
    rows = chunk * b_pad

    # Pad once with jnp.pad (no zeros+scatter), cast x to bf16, flatten (T, B)
    # so each grid step gets one lane-dense 2-D slab and the kernel needs no
    # in-kernel reshapes.
    x_p = jnp.pad(x_seq.astype(jnp.bfloat16),
                  ((0, t_pad - T), (0, b_pad - B), (0, i_pad - input_size)))
    x2d = x_p.reshape(t_pad * b_pad, i_pad)
    h_p = jnp.pad(h0.astype(jnp.float32), ((0, b_pad - B), (0, 0)))

    kernel = functools.partial(
        rnn_chunk_kernel, hidden_size=hidden_size, chunk=chunk,
        b_pad=b_pad, seq_len=T, unroll=min(UNROLL, chunk))

    out2d, h_final_p = pl.pallas_call(
        kernel,
        out_shape=(
            jax.ShapeDtypeStruct((t_pad * b_pad, o_pad), jnp.float32),
            jax.ShapeDtypeStruct((b_pad, hidden_size), jnp.float32),
        ),
        grid_spec=pltpu.PrefetchScalarGridSpec(
            num_scalar_prefetch=0,
            grid=(n_chunks,),
            in_specs=[
                # per-chunk input slab (double-buffered by Pallas)
                pl.BlockSpec((rows, i_pad), lambda c: (c, 0)),
                # everything below stays VMEM-resident for the whole sequence
                pl.BlockSpec((b_pad, hidden_size), lambda c: (0, 0)),
                pl.BlockSpec((i_pad, n_fused), lambda c: (0, 0)),
                pl.BlockSpec((hidden_size, n_fused), lambda c: (0, 0)),
                pl.BlockSpec((1, n_fused), lambda c: (0, 0)),
            ],
            out_specs=(
                pl.BlockSpec((rows, o_pad), lambda c: (c, 0)),
                pl.BlockSpec((b_pad, hidden_size), lambda c: (0, 0)),
            ),
            scratch_shapes=[
                pltpu.VMEM((b_pad, hidden_size), jnp.float32),   # carried h
                pltpu.VMEM((rows, n_fused), jnp.float32),        # hoisted xproj
            ],
        ),
        compiler_params=pltpu.CompilerParams(
            dimension_semantics=("arbitrary",)),   # recurrence => sequential
    )(x2d, h_p, wx, wh, bias)

    out = out2d.reshape(t_pad, b_pad, o_pad)[:T, :B, :output_size]
    h_final = h_final_p[:B, :]
    return out, h_final


# ------------------------------ references ------------------------------------
def _ref_sequence_f32(x_seq, h0, w_i2h, b_i2h, w_i2o, b_i2o):
    """Pure-JAX f32 replica of the PyTorch module's forward, scanned over T."""
    def step(h, x):
        combined = jnp.concatenate([x, h], axis=1)
        new_h = combined @ w_i2h.T + b_i2h
        logits = combined @ w_i2o.T + b_i2o
        return new_h, jax.nn.log_softmax(logits, axis=1)
    h_final, outs = lax.scan(step, h0, x_seq)
    return outs, h_final


def _ref_sequence_matched(x_seq, h0, wx, wh, bias, *,
                          input_size, hidden_size, output_size):
    """Same semantics computed with the kernel's bf16 fused weights (precision-
    matched reference for long sequences)."""
    i_pad = wx.shape[0]
    x_p = jnp.pad(x_seq.astype(jnp.bfloat16),
                  ((0, 0), (0, 0), (0, i_pad - input_size)))

    def step(h, x):
        xp = jnp.dot(x, wx, preferred_element_type=jnp.float32) + bias
        y = xp + jnp.dot(h.astype(jnp.bfloat16), wh,
                         preferred_element_type=jnp.float32)
        new_h = y[:, :hidden_size]
        out = jax.nn.log_softmax(y[:, hidden_size:hidden_size + output_size], axis=1)
        return new_h, out

    h_final, outs = lax.scan(step, h0.astype(jnp.float32), x_p)
    return outs, h_final


# --------------------------------- demo ---------------------------------------
if __name__ == "__main__":
    key = jax.random.PRNGKey(0)
    k1, k2, k3, k4, k5 = jax.random.split(key, 5)

    in_plus_hid = N_LETTERS + N_HIDDEN
    bound = 1.0 / jnp.sqrt(in_plus_hid)
    w_i2h = jax.random.uniform(k1, (N_HIDDEN, in_plus_hid), jnp.float32, -bound, bound)
    b_i2h = jax.random.uniform(k2, (N_HIDDEN,), jnp.float32, -bound, bound)
    w_i2o = jax.random.uniform(k3, (N_CATEGORIES, in_plus_hid), jnp.float32, -bound, bound)
    b_i2o = jax.random.uniform(k4, (N_CATEGORIES,), jnp.float32, -bound, bound)

    # One-time (hoisted) weight fusion / padding / transposition / bf16 cast.
    wx, wh, bias = prepare_params(w_i2h, b_i2h, w_i2o, b_i2o,
                                  N_LETTERS, N_HIDDEN, N_CATEGORIES)

    # --- test 1: tutorial-style "name", 8 one-hot chars, batch=1 --------------
    name = "Albert A"
    T, B = len(name), 1
    x_seq = jnp.zeros((T, B, N_LETTERS), jnp.float32)
    for t, ch in enumerate(name):
        x_seq = x_seq.at[t, 0, all_letters.find(ch)].set(1.0)
    h0 = jnp.zeros((B, N_HIDDEN), jnp.float32)

    out_seq, h_final = rnn_sequence(x_seq, h0, wx, wh, bias,
                                    input_size=N_LETTERS,
                                    hidden_size=N_HIDDEN,
                                    output_size=N_CATEGORIES)
    out_seq = jax.block_until_ready(out_seq)
    h_final = jax.block_until_ready(h_final)

    ref_out, ref_h = _ref_sequence_f32(x_seq, h0, w_i2h, b_i2h, w_i2o, b_i2o)
    assert out_seq.shape == (T, B, N_CATEGORIES)
    assert h_final.shape == (B, N_HIDDEN)
    assert jnp.allclose(out_seq, ref_out, atol=3e-2), "per-step log_softmax mismatch"
    assert jnp.allclose(h_final, ref_h, atol=3e-2), "final hidden state mismatch"

    # --- test 2: single step (T=1), identical to PyTorch single forward -------
    out1, h1 = rnn_sequence(x_seq[:1], h0, wx, wh, bias,
                            input_size=N_LETTERS, hidden_size=N_HIDDEN,
                            output_size=N_CATEGORIES)
    out1 = jax.block_until_ready(out1)
    ref_o1, ref_h1 = _ref_sequence_f32(x_seq[:1], h0, w_i2h, b_i2h, w_i2o, b_i2o)
    assert jnp.allclose(out1, ref_o1, atol=3e-2), "single-step output mismatch"
    assert jnp.allclose(h1, ref_h1, atol=3e-2), "single-step hidden mismatch"

    # --- test 3: multi-chunk path (T=300 > chunk, batch=2, ragged tail) -------
    T2, B2 = 300, 2
    x_long = jax.random.uniform(k5, (T2, B2, N_LETTERS), jnp.float32)
    h0_long = jnp.zeros((B2, N_HIDDEN), jnp.float32)
    out_long, h_long = rnn_sequence(x_long, h0_long, wx, wh, bias,
                                    input_size=N_LETTERS, hidden_size=N_HIDDEN,
                                    output_size=N_CATEGORIES)
    out_long = jax.block_until_ready(out_long)
    ref_ol, ref_hl = _ref_sequence_matched(x_long, h0_long, wx, wh, bias,
                                           input_size=N_LETTERS,
                                           hidden_size=N_HIDDEN,
                                           output_size=N_CATEGORIES)
    assert jnp.allclose(out_long, ref_ol, atol=2e-2), "multi-chunk output mismatch"
    assert jnp.allclose(h_long, ref_hl, atol=2e-2), "multi-chunk hidden mismatch"

    print("KERNEL_OK")
</pallas_src>

<mosaic_0001>
module attributes {stable_mosaic.version = 11 : i64} {
  func.func @rnn_chunk_kernel(%arg0: i32, %arg1: memref<128x64xbf16, #tpu.memory_space<vmem>>, %arg2: memref<16x128xf32, #tpu.memory_space<vmem>>, %arg3: memref<64x256xbf16, #tpu.memory_space<vmem>>, %arg4: memref<128x256xbf16, #tpu.memory_space<vmem>>, %arg5: memref<1x256xf32, #tpu.memory_space<vmem>>, %arg6: memref<128x128xf32, #tpu.memory_space<vmem>>, %arg7: memref<16x128xf32, #tpu.memory_space<vmem>>, %arg8: memref<16x128xf32, #tpu.memory_space<vmem>>, %arg9: memref<128x256xf32, #tpu.memory_space<vmem>>) attributes {dimension_semantics = [#tpu.dimension_semantics<arbitrary>], iteration_bounds = array<i64: 1>, scalar_prefetch = 0 : i64, scratch_operands = 2 : i64, tpu.core_type = #tpu.core_type<tc>, window_params = [{transform_indices = @transform_0, window_bounds = array<i64: 128, 64>}, {pipeline_mode = #tpu.pipeline_mode<synchronous>, transform_indices = @transform_1, window_bounds = array<i64: 16, 128>}, {pipeline_mode = #tpu.pipeline_mode<synchronous>, transform_indices = @transform_2, window_bounds = array<i64: 64, 256>}, {pipeline_mode = #tpu.pipeline_mode<synchronous>, transform_indices = @transform_3, window_bounds = array<i64: 128, 256>}, {pipeline_mode = #tpu.pipeline_mode<synchronous>, transform_indices = @transform_4, window_bounds = array<i64: 1, 256>}, {transform_indices = @transform_5, window_bounds = array<i64: 128, 128>}, {pipeline_mode = #tpu.pipeline_mode<synchronous>, transform_indices = @transform_6, window_bounds = array<i64: 16, 128>}]} {
    %c0_i32 = arith.constant 0 : i32
    %0 = arith.cmpi eq, %arg0, %c0_i32 : i32
    %1 = arith.extui %0 : i1 to i32
    %c0_i32_0 = arith.constant 0 : i32
    %2 = arith.cmpi ne, %1, %c0_i32_0 : i32
    scf.if %2 {
      %c0_80 = arith.constant 0 : index
      %c0_81 = arith.constant 0 : index
      %214 = vector.load %arg2[%c0_80, %c0_81] : memref<16x128xf32, #tpu.memory_space<vmem>>, vector<16x128xf32>
      %c0_82 = arith.constant 0 : index
      %c0_83 = arith.constant 0 : index
      %215 = vector.load %arg8[%c0_82, %c0_83] : memref<16x128xf32, #tpu.memory_space<vmem>>, vector<16x128xf32>
      tpu.vector_store %arg8[%c0_82, %c0_83], %214 {strides = array<i32>} : memref<16x128xf32, #tpu.memory_space<vmem>>, vector<16x128xf32>,
    } else {
    }
    %c0 = arith.constant 0 : index
    %c0_1 = arith.constant 0 : index
    %3 = vector.load %arg1[%c0, %c0_1] : memref<128x64xbf16, #tpu.memory_space<vmem>>, vector<128x64xbf16>
    %c0_2 = arith.constant 0 : index
    %c0_3 = arith.constant 0 : index
    %4 = vector.load %arg3[%c0_2, %c0_3] : memref<64x256xbf16, #tpu.memory_space<vmem>>, vector<64x256xbf16>
    %cst = arith.constant dense<0.000000e+00> : vector<128x256xf32>
    %5 = tpu.matmul %3, %4, %cst {dimension_numbers = #tpu.dot_dimension_numbers<[1], [0], [0], [1], [0, 0, 1, 1], [], []>} : vector<128x64xbf16>, vector<64x256xbf16>, vector<128x256xf32> -> vector<128x256xf32>
    %c0_4 = arith.constant 0 : index
    %c0_5 = arith.constant 0 : index
    %6 = vector.load %arg5[%c0_4, %c0_5] : memref<1x256xf32, #tpu.memory_space<vmem>>, vector<1x256xf32>
    %7 = vector.broadcast %6 : vector<1x256xf32> to vector<128x256xf32>
    %8 = arith.addf %5, %7 : vector<128x256xf32>
    %c0_6 = arith.constant 0 : index
    %c0_7 = arith.constant 0 : index
    %9 = vector.load %arg9[%c0_6, %c0_7] : memref<128x256xf32, #tpu.memory_space<vmem>>, vector<128x256xf32>
    tpu.vector_store %arg9[%c0_6, %c0_7], %8 {strides = array<i32>} : memref<128x256xf32, #tpu.memory_space<vmem>>, vector<128x256xf32>,
    %c0_8 = arith.constant 0 : index
    %c0_9 = arith.constant 0 : index
    %10 = vector.load %arg4[%c0_8, %c0_9] : memref<128x256xbf16, #tpu.memory_space<vmem>>, vector<128x256xbf16>
    %c0_10 = arith.constant 0 : index
    %c0_11 = arith.constant 0 : index
    %11 = vector.load %arg8[%c0_10, %c0_11] : memref<16x128xf32, #tpu.memory_space<vmem>>, vector<16x128xf32>
    %c0_i32_12 = arith.constant 0 : i32
    %c16_i32 = arith.constant 16 : i32
    %12 = arith.muli %c0_i32_12, %c16_i32 : i32
    %13 = tpu.assume_multiple %12, 16 : i32
    %14 = arith.index_cast %13 : i32 to index
    %c0_13 = arith.constant 0 : index
    %15 = vector.load %arg9[%14, %c0_13] : memref<128x256xf32, #tpu.memory_space<vmem>>, vector<16x256xf32>
    %16 = arith.truncf %11 : vector<16x128xf32> to vector<16x128xbf16>
    %cst_14 = arith.constant dense<0.000000e+00> : vector<16x256xf32>
    %17 = tpu.matmul %16, %10, %cst_14 {dimension_numbers = #tpu.dot_dimension_numbers<[1], [0], [0], [1], [0, 0, 1, 1], [], []>} : vector<16x128xbf16>, vector<128x256xbf16>, vector<16x256xf32> -> vector<16x256xf32>
    %18 = arith.addf %15, %17 : vector<16x256xf32>
    %19 = vector.extract_strided_slice %18 {offsets = [0, 0], sizes = [16, 128], strides = [1, 1]} : vector<16x256xf32> to vector<16x128xf32>
    %20 = vector.extract_strided_slice %18 {offsets = [0, 128], sizes = [16, 128], strides = [1, 1]} : vector<16x256xf32> to vector<16x128xf32>
    %cst_15 = arith.constant dense<0xFF800000> : vector<16xf32>
    %21 = vector.multi_reduction <maximumf>, %20, %cst_15 [1] : vector<16x128xf32> to vector<16xf32>
    %22 = vector.shape_cast %21 : vector<16xf32> to vector<16x1xf32>
    %23 = vector.broadcast %22 : vector<16x1xf32> to vector<16x128xf32>
    %24 = arith.subf %20, %23 : vector<16x128xf32>
    %25 = math.exp %24 : vector<16x128xf32>
    %cst_16 = arith.constant dense<0.000000e+00> : vector<16xf32>
    %26 = vector.multi_reduction <add>, %25, %cst_16 [1] : vector<16x128xf32> to vector<16xf32>
    %27 = vector.shape_cast %26 : vector<16xf32> to vector<16x1xf32>
    %28 = math.log %27 : vector<16x1xf32>
    %29 = vector.broadcast %28 : vector<16x1xf32> to vector<16x128xf32>
    %30 = arith.subf %24, %29 : vector<16x128xf32>
    %31 = arith.index_cast %13 : i32 to index
    %c0_17 = arith.constant 0 : index
    %32 = vector.load %arg6[%31, %c0_17] : memref<128x128xf32, #tpu.memory_space<vmem>>, vector<16x128xf32>
    tpu.vector_store %arg6[%31, %c0_17], %30 {strides = array<i32>} : memref<128x128xf32, #tpu.memory_space<vmem>>, vector<16x128xf32>,
    %c8_i32 = arith.constant 8 : i32
    %33 = arith.muli %arg0, %c8_i32 : i32
    %34 = arith.addi %33, %c0_i32_12 : i32
    %c8_i32_18 = arith.constant 8 : i32
    %35 = arith.cmpi slt, %34, %c8_i32_18 : i32
    %36 = arith.select %35, %19, %11 : vector<16x128xf32>
    %c1_i32 = arith.constant 1 : i32
    %c16_i32_19 = arith.constant 16 : i32
    %37 = arith.muli %c1_i32, %c16_i32_19 : i32
    %38 = tpu.assume_multiple %37, 16 : i32
    %39 = arith.index_cast %38 : i32 to index
    %c0_20 = arith.constant 0 : index
    %40 = vector.load %arg9[%39, %c0_20] : memref<128x256xf32, #tpu.memory_space<vmem>>, vector<16x256xf32>
    %41 = arith.truncf %36 : vector<16x128xf32> to vector<16x128xbf16>
    %cst_21 = arith.constant dense<0.000000e+00> : vector<16x256xf32>
    %42 = tpu.matmul %41, %10, %cst_21 {dimension_numbers = #tpu.dot_dimension_numbers<[1], [0], [0], [1], [0, 0, 1, 1], [], []>} : vector<16x128xbf16>, vector<128x256xbf16>, vector<16x256xf32> -> vector<16x256xf32>
    %43 = arith.addf %40, %42 : vector<16x256xf32>
    %44 = vector.extract_strided_slice %43 {offsets = [0, 0], sizes = [16, 128], strides = [1, 1]} : vector<16x256xf32> to vector<16x128xf32>
    %45 = vector.extract_strided_slice %43 {offsets = [0, 128], sizes = [16, 128], strides = [1, 1]} : vector<16x256xf32> to vector<16x128xf32>
    %cst_22 = arith.constant dense<0xFF800000> : vector<16xf32>
    %46 = vector.multi_reduction <maximumf>, %45, %cst_22 [1] : vector<16x128xf32> to vector<16xf32>
    %47 = vector.shape_cast %46 : vector<16xf32> to vector<16x1xf32>
    %48 = vector.broadcast %47 : vector<16x1xf32> to vector<16x128xf32>
    %49 = arith.subf %45, %48 : vector<16x128xf32>
    %50 = math.exp %49 : vector<16x128xf32>
    %cst_23 = arith.constant dense<0.000000e+00> : vector<16xf32>
    %51 = vector.multi_reduction <add>, %50, %cst_23 [1] : vector<16x128xf32> to vector<16xf32>
    %52 = vector.shape_cast %51 : vector<16xf32> to vector<16x1xf32>
    %53 = math.log %52 : vector<16x1xf32>
    %54 = vector.broadcast %53 : vector<16x1xf32> to vector<16x128xf32>
    %55 = arith.subf %49, %54 : vector<16x128xf32>
    %56 = arith.index_cast %38 : i32 to index
    %c0_24 = arith.constant 0 : index
    %57 = vector.load %arg6[%56, %c0_24] : memref<128x128xf32, #tpu.memory_space<vmem>>, vector<16x128xf32>
    tpu.vector_store %arg6[%56, %c0_24], %55 {strides = array<i32>} : memref<128x128xf32, #tpu.memory_space<vmem>>, vector<16x128xf32>,
    %c8_i32_25 = arith.constant 8 : i32
    %58 = arith.muli %arg0, %c8_i32_25 : i32
    %59 = arith.addi %58, %c1_i32 : i32
    %c8_i32_26 = arith.constant 8 : i32
    %60 = arith.cmpi slt, %59, %c8_i32_26 : i32
    %61 = arith.select %60, %44, %36 : vector<16x128xf32>
    %c2_i32 = arith.constant 2 : i32
    %c16_i32_27 = arith.constant 16 : i32
    %62 = arith.muli %c2_i32, %c16_i32_27 : i32
    %63 = tpu.assume_multiple %62, 16 : i32
    %64 = arith.index_cast %63 : i32 to index
    %c0_28 = arith.constant 0 : index
    %65 = vector.load %arg9[%64, %c0_28] : memref<128x256xf32, #tpu.memory_space<vmem>>, vector<16x256xf32>
    %66 = arith.truncf %61 : vector<16x128xf32> to vector<16x128xbf16>
    %cst_29 = arith.constant dense<0.000000e+00> : vector<16x256xf32>
    %67 = tpu.matmul %66, %10, %cst_29 {dimension_numbers = #tpu.dot_dimension_numbers<[1], [0], [0], [1], [0, 0, 1, 1], [], []>} : vector<16x128xbf16>, vector<128x256xbf16>, vector<16x256xf32> -> vector<16x256xf32>
    %68 = arith.addf %65, %67 : vector<16x256xf32>
    %69 = vector.extract_strided_slice %68 {offsets = [0, 0], sizes = [16, 128], strides = [1, 1]} : vector<16x256xf32> to vector<16x128xf32>
    %70 = vector.extract_strided_slice %68 {offsets = [0, 128], sizes = [16, 128], strides = [1, 1]} : vector<16x256xf32> to vector<16x128xf32>
    %cst_30 = arith.constant dense<0xFF800000> : vector<16xf32>
    %71 = vector.multi_reduction <maximumf>, %70, %cst_30 [1] : vector<16x128xf32> to vector<16xf32>
    %72 = vector.shape_cast %71 : vector<16xf32> to vector<16x1xf32>
    %73 = vector.broadcast %72 : vector<16x1xf32> to vector<16x128xf32>
    %74 = arith.subf %70, %73 : vector<16x128xf32>
    %75 = math.exp %74 : vector<16x128xf32>
    %cst_31 = arith.constant dense<0.000000e+00> : vector<16xf32>
    %76 = vector.multi_reduction <add>, %75, %cst_31 [1] : vector<16x128xf32> to vector<16xf32>
    %77 = vector.shape_cast %76 : vector<16xf32> to vector<16x1xf32>
    %78 = math.log %77 : vector<16x1xf32>
    %79 = vector.broadcast %78 : vector<16x1xf32> to vector<16x128xf32>
    %80 = arith.subf %74, %79 : vector<16x128xf32>
    %81 = arith.index_cast %63 : i32 to index
    %c0_32 = arith.constant 0 : index
    %82 = vector.load %arg6[%81, %c0_32] : memref<128x128xf32, #tpu.memory_space<vmem>>, vector<16x128xf32>
    tpu.vector_store %arg6[%81, %c0_32], %80 {strides = array<i32>} : memref<128x128xf32, #tpu.memory_space<vmem>>, vector<16x128xf32>,
    %c8_i32_33 = arith.constant 8 : i32
    %83 = arith.muli %arg0, %c8_i32_33 : i32
    %84 = arith.addi %83, %c2_i32 : i32
    %c8_i32_34 = arith.constant 8 : i32
    %85 = arith.cmpi slt, %84, %c8_i32_34 : i32
    %86 = arith.select %85, %69, %61 : vector<16x128xf32>
    %c3_i32 = arith.constant 3 : i32
    %c16_i32_35 = arith.constant 16 : i32
    %87 = arith.muli %c3_i32, %c16_i32_35 : i32
    %88 = tpu.assume_multiple %87, 16 : i32
    %89 = arith.index_cast %88 : i32 to index
    %c0_36 = arith.constant 0 : index
    %90 = vector.load %arg9[%89, %c0_36] : memref<128x256xf32, #tpu.memory_space<vmem>>, vector<16x256xf32>
    %91 = arith.truncf %86 : vector<16x128xf32> to vector<16x128xbf16>
    %cst_37 = arith.constant dense<0.000000e+00> : vector<16x256xf32>
    %92 = tpu.matmul %91, %10, %cst_37 {dimension_numbers = #tpu.dot_dimension_numbers<[1], [0], [0], [1], [0, 0, 1, 1], [], []>} : vector<16x128xbf16>, vector<128x256xbf16>, vector<16x256xf32> -> vector<16x256xf32>
    %93 = arith.addf %90, %92 : vector<16x256xf32>
    %94 = vector.extract_strided_slice %93 {offsets = [0, 0], sizes = [16, 128], strides = [1, 1]} : vector<16x256xf32> to vector<16x128xf32>
    %95 = vector.extract_strided_slice %93 {offsets = [0, 128], sizes = [16, 128], strides = [1, 1]} : vector<16x256xf32> to vector<16x128xf32>
    %cst_38 = arith.constant dense<0xFF800000> : vector<16xf32>
    %96 = vector.multi_reduction <maximumf>, %95, %cst_38 [1] : vector<16x128xf32> to vector<16xf32>
    %97 = vector.shape_cast %96 : vector<16xf32> to vector<16x1xf32>
    %98 = vector.broadcast %97 : vector<16x1xf32> to vector<16x128xf32>
    %99 = arith.subf %95, %98 : vector<16x128xf32>
    %100 = math.exp %99 : vector<16x128xf32>
    %cst_39 = arith.constant dense<0.000000e+00> : vector<16xf32>
    %101 = vector.multi_reduction <add>, %100, %cst_39 [1] : vector<16x128xf32> to vector<16xf32>
    %102 = vector.shape_cast %101 : vector<16xf32> to vector<16x1xf32>
    %103 = math.log %102 : vector<16x1xf32>
    %104 = vector.broadcast %103 : vector<16x1xf32> to vector<16x128xf32>
    %105 = arith.subf %99, %104 : vector<16x128xf32>
    %106 = arith.index_cast %88 : i32 to index
    %c0_40 = arith.constant 0 : index
    %107 = vector.load %arg6[%106, %c0_40] : memref<128x128xf32, #tpu.memory_space<vmem>>, vector<16x128xf32>
    tpu.vector_store %arg6[%106, %c0_40], %105 {strides = array<i32>} : memref<128x128xf32, #tpu.memory_space<vmem>>, vector<16x128xf32>,
    %c8_i32_41 = arith.constant 8 : i32
    %108 = arith.muli %arg0, %c8_i32_41 : i32
    %109 = arith.addi %108, %c3_i32 : i32
    %c8_i32_42 = arith.constant 8 : i32
    %110 = arith.cmpi slt, %109, %c8_i32_42 : i32
    %111 = arith.select %110, %94, %86 : vector<16x128xf32>
    %c4_i32 = arith.constant 4 : i32
    %c16_i32_43 = arith.constant 16 : i32
    %112 = arith.muli %c4_i32, %c16_i32_43 : i32
    %113 = tpu.assume_multiple %112, 16 : i32
    %114 = arith.index_cast %113 : i32 to index
    %c0_44 = arith.constant 0 : index
    %115 = vector.load %arg9[%114, %c0_44] : memref<128x256xf32, #tpu.memory_space<vmem>>, vector<16x256xf32>
    %116 = arith.truncf %111 : vector<16x128xf32> to vector<16x128xbf16>
    %cst_45 = arith.constant dense<0.000000e+00> : vector<16x256xf32>
    %117 = tpu.matmul %116, %10, %cst_45 {dimension_numbers = #tpu.dot_dimension_numbers<[1], [0], [0], [1], [0, 0, 1, 1], [], []>} : vector<16x128xbf16>, vector<128x256xbf16>, vector<16x256xf32> -> vector<16x256xf32>
    %118 = arith.addf %115, %117 : vector<16x256xf32>
    %119 = vector.extract_strided_slice %118 {offsets = [0, 0], sizes = [16, 128], strides = [1, 1]} : vector<16x256xf32> to vector<16x128xf32>
    %120 = vector.extract_strided_slice %118 {offsets = [0, 128], sizes = [16, 128], strides = [1, 1]} : vector<16x256xf32> to vector<16x128xf32>
    %cst_46 = arith.constant dense<0xFF800000> : vector<16xf32>
    %121 = vector.multi_reduction <maximumf>, %120, %cst_46 [1] : vector<16x128xf32> to vector<16xf32>
    %122 = vector.shape_cast %121 : vector<16xf32> to vector<16x1xf32>
    %123 = vector.broadcast %122 : vector<16x1xf32> to vector<16x128xf32>
    %124 = arith.subf %120, %123 : vector<16x128xf32>
    %125 = math.exp %124 : vector<16x128xf32>
    %cst_47 = arith.constant dense<0.000000e+00> : vector<16xf32>
    %126 = vector.multi_reduction <add>, %125, %cst_47 [1] : vector<16x128xf32> to vector<16xf32>
    %127 = vector.shape_cast %126 : vector<16xf32> to vector<16x1xf32>
    %128 = math.log %127 : vector<16x1xf32>
    %129 = vector.broadcast %128 : vector<16x1xf32> to vector<16x128xf32>
    %130 = arith.subf %124, %129 : vector<16x128xf32>
    %131 = arith.index_cast %113 : i32 to index
    %c0_48 = arith.constant 0 : index
    %132 = vector.load %arg6[%131, %c0_48] : memref<128x128xf32, #tpu.memory_space<vmem>>, vector<16x128xf32>
    tpu.vector_store %arg6[%131, %c0_48], %130 {strides = array<i32>} : memref<128x128xf32, #tpu.memory_space<vmem>>, vector<16x128xf32>,
    %c8_i32_49 = arith.constant 8 : i32
    %133 = arith.muli %arg0, %c8_i32_49 : i32
    %134 = arith.addi %133, %c4_i32 : i32
    %c8_i32_50 = arith.constant 8 : i32
    %135 = arith.cmpi slt, %134, %c8_i32_50 : i32
    %136 = arith.select %135, %119, %111 : vector<16x128xf32>
    %c5_i32 = arith.constant 5 : i32
    %c16_i32_51 = arith.constant 16 : i32
    %137 = arith.muli %c5_i32, %c16_i32_51 : i32
    %138 = tpu.assume_multiple %137, 16 : i32
    %139 = arith.index_cast %138 : i32 to index
    %c0_52 = arith.constant 0 : index
    %140 = vector.load %arg9[%139, %c0_52] : memref<128x256xf32, #tpu.memory_space<vmem>>, vector<16x256xf32>
    %141 = arith.truncf %136 : vector<16x128xf32> to vector<16x128xbf16>
    %cst_53 = arith.constant dense<0.000000e+00> : vector<16x256xf32>
    %142 = tpu.matmul %141, %10, %cst_53 {dimension_numbers = #tpu.dot_dimension_numbers<[1], [0], [0], [1], [0, 0, 1, 1], [], []>} : vector<16x128xbf16>, vector<128x256xbf16>, vector<16x256xf32> -> vector<16x256xf32>
    %143 = arith.addf %140, %142 : vector<16x256xf32>
    %144 = vector.extract_strided_slice %143 {offsets = [0, 0], sizes = [16, 128], strides = [1, 1]} : vector<16x256xf32> to vector<16x128xf32>
    %145 = vector.extract_strided_slice %143 {offsets = [0, 128], sizes = [16, 128], strides = [1, 1]} : vector<16x256xf32> to vector<16x128xf32>
    %cst_54 = arith.constant dense<0xFF800000> : vector<16xf32>
    %146 = vector.multi_reduction <maximumf>, %145, %cst_54 [1] : vector<16x128xf32> to vector<16xf32>
    %147 = vector.shape_cast %146 : vector<16xf32> to vector<16x1xf32>
    %148 = vector.broadcast %147 : vector<16x1xf32> to vector<16x128xf32>
    %149 = arith.subf %145, %148 : vector<16x128xf32>
    %150 = math.exp %149 : vector<16x128xf32>
    %cst_55 = arith.constant dense<0.000000e+00> : vector<16xf32>
    %151 = vector.multi_reduction <add>, %150, %cst_55 [1] : vector<16x128xf32> to vector<16xf32>
    %152 = vector.shape_cast %151 : vector<16xf32> to vector<16x1xf32>
    %153 = math.log %152 : vector<16x1xf32>
    %154 = vector.broadcast %153 : vector<16x1xf32> to vector<16x128xf32>
    %155 = arith.subf %149, %154 : vector<16x128xf32>
    %156 = arith.index_cast %138 : i32 to index
    %c0_56 = arith.constant 0 : index
    %157 = vector.load %arg6[%156, %c0_56] : memref<128x128xf32, #tpu.memory_space<vmem>>, vector<16x128xf32>
    tpu.vector_store %arg6[%156, %c0_56], %155 {strides = array<i32>} : memref<128x128xf32, #tpu.memory_space<vmem>>, vector<16x128xf32>,
    %c8_i32_57 = arith.constant 8 : i32
    %158 = arith.muli %arg0, %c8_i32_57 : i32
    %159 = arith.addi %158, %c5_i32 : i32
    %c8_i32_58 = arith.constant 8 : i32
    %160 = arith.cmpi slt, %159, %c8_i32_58 : i32
    %161 = arith.select %160, %144, %136 : vector<16x128xf32>
    %c6_i32 = arith.constant 6 : i32
    %c16_i32_59 = arith.constant 16 : i32
    %162 = arith.muli %c6_i32, %c16_i32_59 : i32
    %163 = tpu.assume_multiple %162, 16 : i32
    %164 = arith.index_cast %163 : i32 to index
    %c0_60 = arith.constant 0 : index
    %165 = vector.load %arg9[%164, %c0_60] : memref<128x256xf32, #tpu.memory_space<vmem>>, vector<16x256xf32>
    %166 = arith.truncf %161 : vector<16x128xf32> to vector<16x128xbf16>
    %cst_61 = arith.constant dense<0.000000e+00> : vector<16x256xf32>
    %167 = tpu.matmul %166, %10, %cst_61 {dimension_numbers = #tpu.dot_dimension_numbers<[1], [0], [0], [1], [0, 0, 1, 1], [], []>} : vector<16x128xbf16>, vector<128x256xbf16>, vector<16x256xf32> -> vector<16x256xf32>
    %168 = arith.addf %165, %167 : vector<16x256xf32>
    %169 = vector.extract_strided_slice %168 {offsets = [0, 0], sizes = [16, 128], strides = [1, 1]} : vector<16x256xf32> to vector<16x128xf32>
    %170 = vector.extract_strided_slice %168 {offsets = [0, 128], sizes = [16, 128], strides = [1, 1]} : vector<16x256xf32> to vector<16x128xf32>
    %cst_62 = arith.constant dense<0xFF800000> : vector<16xf32>
    %171 = vector.multi_reduction <maximumf>, %170, %cst_62 [1] : vector<16x128xf32> to vector<16xf32>
    %172 = vector.shape_cast %171 : vector<16xf32> to vector<16x1xf32>
    %173 = vector.broadcast %172 : vector<16x1xf32> to vector<16x128xf32>
    %174 = arith.subf %170, %173 : vector<16x128xf32>
    %175 = math.exp %174 : vector<16x128xf32>
    %cst_63 = arith.constant dense<0.000000e+00> : vector<16xf32>
    %176 = vector.multi_reduction <add>, %175, %cst_63 [1] : vector<16x128xf32> to vector<16xf32>
    %177 = vector.shape_cast %176 : vector<16xf32> to vector<16x1xf32>
    %178 = math.log %177 : vector<16x1xf32>
    %179 = vector.broadcast %178 : vector<16x1xf32> to vector<16x128xf32>
    %180 = arith.subf %174, %179 : vector<16x128xf32>
    %181 = arith.index_cast %163 : i32 to index
    %c0_64 = arith.constant 0 : index
    %182 = vector.load %arg6[%181, %c0_64] : memref<128x128xf32, #tpu.memory_space<vmem>>, vector<16x128xf32>
    tpu.vector_store %arg6[%181, %c0_64], %180 {strides = array<i32>} : memref<128x128xf32, #tpu.memory_space<vmem>>, vector<16x128xf32>,
    %c8_i32_65 = arith.constant 8 : i32
    %183 = arith.muli %arg0, %c8_i32_65 : i32
    %184 = arith.addi %183, %c6_i32 : i32
    %c8_i32_66 = arith.constant 8 : i32
    %185 = arith.cmpi slt, %184, %c8_i32_66 : i32
    %186 = arith.select %185, %169, %161 : vector<16x128xf32>
    %c7_i32 = arith.constant 7 : i32
    %c16_i32_67 = arith.constant 16 : i32
    %187 = arith.muli %c7_i32, %c16_i32_67 : i32
    %188 = tpu.assume_multiple %187, 16 : i32
    %189 = arith.index_cast %188 : i32 to index
    %c0_68 = arith.constant 0 : index
    %190 = vector.load %arg9[%189, %c0_68] : memref<128x256xf32, #tpu.memory_space<vmem>>, vector<16x256xf32>
    %191 = arith.truncf %186 : vector<16x128xf32> to vector<16x128xbf16>
    %cst_69 = arith.constant dense<0.000000e+00> : vector<16x256xf32>
    %192 = tpu.matmul %191, %10, %cst_69 {dimension_numbers = #tpu.dot_dimension_numbers<[1], [0], [0], [1], [0, 0, 1, 1], [], []>} : vector<16x128xbf16>, vector<128x256xbf16>, vector<16x256xf32> -> vector<16x256xf32>
    %193 = arith.addf %190, %192 : vector<16x256xf32>
    %194 = vector.extract_strided_slice %193 {offsets = [0, 0], sizes = [16, 128], strides = [1, 1]} : vector<16x256xf32> to vector<16x128xf32>
    %195 = vector.extract_strided_slice %193 {offsets = [0, 128], sizes = [16, 128], strides = [1, 1]} : vector<16x256xf32> to vector<16x128xf32>
    %cst_70 = arith.constant dense<0xFF800000> : vector<16xf32>
    %196 = vector.multi_reduction <maximumf>, %195, %cst_70 [1] : vector<16x128xf32> to vector<16xf32>
    %197 = vector.shape_cast %196 : vector<16xf32> to vector<16x1xf32>
    %198 = vector.broadcast %197 : vector<16x1xf32> to vector<16x128xf32>
    %199 = arith.subf %195, %198 : vector<16x128xf32>
    %200 = math.exp %199 : vector<16x128xf32>
    %cst_71 = arith.constant dense<0.000000e+00> : vector<16xf32>
    %201 = vector.multi_reduction <add>, %200, %cst_71 [1] : vector<16x128xf32> to vector<16xf32>
    %202 = vector.shape_cast %201 : vector<16xf32> to vector<16x1xf32>
    %203 = math.log %202 : vector<16x1xf32>
    %204 = vector.broadcast %203 : vector<16x1xf32> to vector<16x128xf32>
    %205 = arith.subf %199, %204 : vector<16x128xf32>
    %206 = arith.index_cast %188 : i32 to index
    %c0_72 = arith.constant 0 : index
    %207 = vector.load %arg6[%206, %c0_72] : memref<128x128xf32, #tpu.memory_space<vmem>>, vector<16x128xf32>
    tpu.vector_store %arg6[%206, %c0_72], %205 {strides = array<i32>} : memref<128x128xf32, #tpu.memory_space<vmem>>, vector<16x128xf32>,
    %c8_i32_73 = arith.constant 8 : i32
    %208 = arith.muli %arg0, %c8_i32_73 : i32
    %209 = arith.addi %208, %c7_i32 : i32
    %c8_i32_74 = arith.constant 8 : i32
    %210 = arith.cmpi slt, %209, %c8_i32_74 : i32
    %211 = arith.select %210, %194, %186 : vector<16x128xf32>
    %c8_i32_75 = arith.constant 8 : i32
    %c0_76 = arith.constant 0 : index
    %c0_77 = arith.constant 0 : index
    %212 = vector.load %arg8[%c0_76, %c0_77] : memref<16x128xf32, #tpu.memory_space<vmem>>, vector<16x128xf32>
    tpu.vector_store %arg8[%c0_76, %c0_77], %211 {strides = array<i32>} : memref<16x128xf32, #tpu.memory_space<vmem>>, vector<16x128xf32>,
    %c0_78 = arith.constant 0 : index
    %c0_79 = arith.constant 0 : index
    %213 = vector.load %arg7[%c0_78, %c0_79] : memref<16x128xf32, #tpu.memory_space<vmem>>, vector<16x128xf32>
    tpu.vector_store %arg7[%c0_78, %c0_79], %211 {strides = array<i32>} : memref<16x128xf32, #tpu.memory_space<vmem>>, vector<16x128xf32>,
    return
  }
  func.func @transform_0(%arg0: i32) -> (i32, i32) {
    %c0_i32 = arith.constant 0 : i32
    %c0_i32_0 = arith.constant 0 : i32
    return %arg0, %c0_i32 : i32, i32
  }
  func.func @transform_1(%arg0: i32) -> (i32, i32) {
    %c0_i32 = arith.constant 0 : i32
    %c0_i32_0 = arith.constant 0 : i32
    %c0_i32_1 = arith.constant 0 : i32
    return %c0_i32, %c0_i32_0 : i32, i32
  }
  func.func @transform_2(%arg0: i32) -> (i32, i32) {
    %c0_i32 = arith.constant 0 : i32
    %c0_i32_0 = arith.constant 0 : i32
    %c0_i32_1 = arith.constant 0 : i32
    return %c0_i32, %c0_i32_0 : i32, i32
  }
  func.func @transform_3(%arg0: i32) -> (i32, i32) {
    %c0_i32 = arith.constant 0 : i32
    %c0_i32_0 = arith.constant 0 : i32
    %c0_i32_1 = arith.constant 0 : i32
    return %c0_i32, %c0_i32_0 : i32, i32
  }
  func.func @transform_4(%arg0: i32) -> (i32, i32) {
    %c0_i32 = arith.constant 0 : i32
    %c0_i32_0 = arith.constant 0 : i32
    %c0_i32_1 = arith.constant 0 : i32
    return %c0_i32, %c0_i32_0 : i32, i32
  }
  func.func @transform_5(%arg0: i32) -> (i32, i32) {
    %c0_i32 = arith.constant 0 : i32
    %c0_i32_0 = arith.constant 0 : i32
    return %arg0, %c0_i32 : i32, i32
  }
  func.func @transform_6(%arg0: i32) -> (i32, i32) {
    %c0_i32 = arith.constant 0 : i32
    %c0_i32_0 = arith.constant 0 : i32
    %c0_i32_1 = arith.constant 0 : i32
    return %c0_i32, %c0_i32_0 : i32, i32
  }
}

</mosaic_0001>

<llo_original>
// kernel: rnn_sequence.1
$region0: #{rnn_sequence.1}
  #allocation0 [shape = 'u32[]', space=smem, size = 0x4, offset = 0x4, fixed_abs, tag = 'smem constant byte address 0x4 - core index']
  #allocation1 [shape = 'u32[72,128]{1,0:T(1,128)}', space=vmem, size = 0x9000, scoped, tag = 'internal scratch']
  #allocation2 [shape = 'f32[16,128]{1,0:T(8,128)}', space=vmem, size = 0x2000, scoped, tag = 'scratch operand']
  #allocation3 [shape = 'f32[128,256]{1,0:T(8,128)}', space=vmem, size = 0x20000, scoped, tag = 'scratch operand']
  %s0 = inlined_call_operand.vmem [shape: bf16[128,64], index: 0, kind: input, shape index: {}]
  %s1 = inlined_call_operand.vmem [shape: f32[16,128], index: 1, kind: input, shape index: {}]
  %s2 = inlined_call_operand.vmem [shape: bf16[64,256], index: 2, kind: input, shape index: {}]
  %s3 = inlined_call_operand.hbm [shape: bf16[128,256], index: 3, kind: input, shape index: {}]
  %s4 = inlined_call_operand.vmem [shape: f32[1,256], index: 4, kind: input, shape index: {}]
  %s5 = inlined_call_operand.vmem [shape: f32[128,128], index: 5, kind: output, shape index: {0}]
  %s6 = inlined_call_operand.vmem [shape: f32[16,128], index: 6, kind: output, shape index: {1}]
  %7 = xla_tuple %s5, %s6
  %s8 = sld [smem:[#allocation0]]
  $region46: #{rnn_sequence.1} parent=0
    _
  %s10 = ssub.s32 1, %s8
  %s11 = scalar_select 0, %s10, %s8
  $region1: #{rnn_sequence.1} parent=0
    #allocation4 [shape = 'u8[65536]{0}', space=vmem, size = 0x10000, scoped, tag = 'input window, operand 3, single buffered']
    #allocation5 [shape = 's32[1]{0}', space=sflag, size = 0x4, scoped, tag = 'scoped memory for rnn_sequence.1']
    %12 = vsyncpa [#allocation5], 0
    // Predicated region
    $region2: #{rnn_sequence.1} parent=1 // pred_check
      _
    $region3: #{rnn_sequence.1} parent=1 // pred_check_branch
      %14 = sbr.rel (0) target = $region5
    $region4: #{rnn_sequence.1} parent=1 // pred_region
      _
    $region5: #{rnn_sequence.1} parent=1 // pred_fallthru
      _
    // Predicated region
    $region6: #{rnn_sequence.1} parent=1 // pred_check
      _
    $region7: #{rnn_sequence.1} parent=1 // pred_check_branch
      %16 = sbr.rel (0) target = $region9
    $region8: #{rnn_sequence.1} parent=1 // pred_region
      _
    $region9: #{rnn_sequence.1} parent=1 // pred_fallthru
      _
    // Predicated region
    $region10: #{rnn_sequence.1} parent=1 // pred_check
      _
    $region11: #{rnn_sequence.1} parent=1 // pred_check_branch
      %18 = sbr.rel (0) target = $region13
    $region12: #{rnn_sequence.1} parent=1 // pred_region
      _
    $region13: #{rnn_sequence.1} parent=1 // pred_fallthru
      _
    // Predicated region
    $region14: #{rnn_sequence.1} parent=1 // pred_check
      _
    $region15: #{rnn_sequence.1} parent=1 // pred_check_branch
      %20 = sbr.rel (0) target = $region17
    $region16: #{rnn_sequence.1} parent=1 // pred_region
      %22 = vsyncadd [#allocation5], 0
      %s23 = sshll.u32 %s3, 4
      %s24 = int_to_ptr.hbm [resolvable:$true] %s23
      %s25 = sshll.u32 [#allocation4], 4
      %s26 = int_to_ptr.vmem [resolvable:$true] %s25
      %31 = dma.hbm_to_vmem [thread:$0]  %s24, 2048, %s26, [#allocation5], 128, 128, 8
    $region17: #{rnn_sequence.1} parent=1 // pred_fallthru
      _
    // Predicated region
    $region18: #{rnn_sequence.1} parent=1 // pred_check
      _
    $region19: #{rnn_sequence.1} parent=1 // pred_check_branch
      %33 = sbr.rel (0) target = $region21
    $region20: #{rnn_sequence.1} parent=1 // pred_region
      _
    $region21: #{rnn_sequence.1} parent=1 // pred_fallthru
      _
    // Predicated region
    $region22: #{rnn_sequence.1} parent=1 // pred_check
      _
    $region23: #{rnn_sequence.1} parent=1 // pred_check_branch
      %35 = sbr.rel (0) target = $region25
    $region24: #{rnn_sequence.1} parent=1 // pred_region
      %37 = dma.done [#allocation5], 2048
    $region25: #{rnn_sequence.1} parent=1 // pred_fallthru
      _
    %p39 = scmp.eq.s32.totalorder 0, 0
    // Predicated region
    $region26: #{rnn_sequence.1} parent=1 // pred_check
      %p40 = pneg %p39
    $region27: #{rnn_sequence.1} parent=1 // pred_check_branch
      %42 = sbr.rel (%p40) target = $region29
    $region28: #{rnn_sequence.1} parent=1 // pred_region
      %v43 = vld [vmem:[%s1] sm:$0xff]
      %v44 = vld [vmem:[%s1 + $0x8] sm:$0xff]
      %45 = vst [vmem:[#allocation2] sm:$0xff] %v43
      %46 = vst [vmem:[#allocation2 + $0x8] sm:$0xff] %v44
    $region29: #{rnn_sequence.1} parent=1 // pred_fallthru
      _
    %v47 = vld [vmem:[%s0] sm:$0xf]
    %v48 = vld [vmem:[%s0 + $0x4] sm:$0xf]
    %v49 = vld [vmem:[%s0 + $0x8] sm:$0xf]
    %v50 = vld [vmem:[%s0 + $0xc] sm:$0xf]
    %v51 = vld [vmem:[%s0 + $0x10] sm:$0xf]
    %v52 = vld [vmem:[%s0 + $0x14] sm:$0xf]
    %v53 = vld [vmem:[%s0 + $0x18] sm:$0xf]
    %v54 = vld [vmem:[%s0 + $0x1c] sm:$0xf]
    %v55 = vld [vmem:[%s0 + $0x20] sm:$0xf]
    %v56 = vld [vmem:[%s0 + $0x24] sm:$0xf]
    %v57 = vld [vmem:[%s0 + $0x28] sm:$0xf]
    %v58 = vld [vmem:[%s0 + $0x2c] sm:$0xf]
    %v59 = vld [vmem:[%s0 + $0x30] sm:$0xf]
    %v60 = vld [vmem:[%s0 + $0x34] sm:$0xf]
    %v61 = vld [vmem:[%s0 + $0x38] sm:$0xf]
    %v62 = vld [vmem:[%s0 + $0x3c] sm:$0xf]
    %v63 = vld [vmem:[%s2] sm:$0xff]
    %v64 = vld [vmem:[%s2 + $0x8] sm:$0xff]
    %v65 = vld [vmem:[%s2 + $0x10] sm:$0xff]
    %v66 = vld [vmem:[%s2 + $0x18] sm:$0xff]
    %v67 = vld [vmem:[%s2 + $0x20] sm:$0xff]
    %v68 = vld [vmem:[%s2 + $0x28] sm:$0xff]
    %v69 = vld [vmem:[%s2 + $0x30] sm:$0xff]
    %v70 = vld [vmem:[%s2 + $0x38] sm:$0xff]
    %v71 = vld [vmem:[%s4] sm:$0x3]
    %v73 = vperm.slane %v71, 0
    %v74 = vperm.slane %v71, 1
    %v93 = vunpack.c.l.b16 %v47
    %v94 = vunpack.c.l.b16 %v48
    %v95 = vunpack.c.l.b16 %v49
    %v96 = vunpack.c.l.b16 %v50
    %v97 = vunpack.c.l.b16 %v51
    %v98 = vunpack.c.l.b16 %v52
    %v99 = vunpack.c.l.b16 %v53
    %v100 = vunpack.c.l.b16 %v54
    %v101 = vunpack.c.l.b16 %v55
    %v102 = vunpack.c.l.b16 %v56
    %v103 = vunpack.c.l.b16 %v57
    %v104 = vunpack.c.l.b16 %v58
    %v105 = vunpack.c.l.b16 %v59
    %v106 = vunpack.c.l.b16 %v60
    %v107 = vunpack.c.l.b16 %v61
    %v108 = vunpack.c.l.b16 %v62
    %v109 = vpack.c.b16 %v94, %v93
    %v110 = vpack.c.b16 %v96, %v95
    %v111 = vpack.c.b16 %v98, %v97
    %v112 = vpack.c.b16 %v100, %v99
    %v113 = vpack.c.b16 %v102, %v101
    %v114 = vpack.c.b16 %v104, %v103
    %v115 = vpack.c.b16 %v106, %v105
    %v116 = vpack.c.b16 %v108, %v107
    %v125 = vunpack.c.l.b16 %v63
    %v126 = vunpack.c.h.b16 %v63
    %v127 = vunpack.c.l.b16 %v64
    %v128 = vunpack.c.h.b16 %v64
    %v129 = vunpack.c.l.b16 %v65
    %v130 = vunpack.c.h.b16 %v65
    %v131 = vunpack.c.l.b16 %v66
    %v132 = vunpack.c.h.b16 %v66
    %v133 = vunpack.c.l.b16 %v67
    %v134 = vunpack.c.h.b16 %v67
    %v135 = vunpack.c.l.b16 %v68
    %v136 = vunpack.c.h.b16 %v68
    %v137 = vunpack.c.l.b16 %v69
    %v138 = vunpack.c.h.b16 %v69
    %v139 = vunpack.c.l.b16 %v70
    %v140 = vunpack.c.h.b16 %v70
    %v141 = vpack.c.b16 %v127, %v125
    %v142 = vpack.c.b16 %v128, %v126
    %v143 = vpack.c.b16 %v131, %v129
    %v144 = vpack.c.b16 %v132, %v130
    %v145 = vpack.c.b16 %v135, %v133
    %v146 = vpack.c.b16 %v136, %v134
    %v147 = vpack.c.b16 %v139, %v137
    %v148 = vpack.c.b16 %v140, %v138
    %vm157 = vcmask 523264
    %v159 = vsel %vm157, %v109, 0
    %v162 = vsel %vm157, %v110, 0
    %v165 = vsel %vm157, %v111, 0
    %v168 = vsel %vm157, %v112, 0
    %v171 = vsel %vm157, %v113, 0
    %v174 = vsel %vm157, %v114, 0
    %v177 = vsel %vm157, %v115, 0
    %v180 = vsel %vm157, %v116, 0
    %182 = vmatpush.bf16.msra.mxu0 0
    %183 = vmatpush.bf16.msra.mxu0 0
    %184 = vmatpush.bf16.msra.mxu0 0
    %185 = vmatpush.bf16.msra.mxu0 0
    %186 = vmatpush.bf16.msra.mxu0 %v147
    %187 = vmatpush.bf16.msra.mxu0 %v145
    %188 = vmatpush.bf16.msra.mxu0 %v143
    %189 = vmatpush.bf16.msra.mxu0 %v141
    %190 = vmatmul.bf16.gmra.mxu0 %v159
    %v191 = vpop.f32.mrf.mxu0
    %v192 = vadd.f32 %v73, %v191
    %v193 = vpop.f32.mrf.mxu0
    %v194 = vadd.f32 %v73, %v193
    %195 = vmatmul.bf16.gmra.mxu0 %v162
    %v196 = vpop.f32.mrf.mxu0
    %v197 = vadd.f32 %v73, %v196
    %v198 = vpop.f32.mrf.mxu0
    %v199 = vadd.f32 %v73, %v198
    %200 = vmatmul.bf16.gmra.mxu0 %v165
    %v201 = vpop.f32.mrf.mxu0
    %v202 = vadd.f32 %v73, %v201
    %v203 = vpop.f32.mrf.mxu0
    %v204 = vadd.f32 %v73, %v203
    %205 = vmatmul.bf16.gmra.mxu0 %v168
    %v206 = vpop.f32.mrf.mxu0
    %v207 = vadd.f32 %v73, %v206
    %v208 = vpop.f32.mrf.mxu0
    %v209 = vadd.f32 %v73, %v208
    %210 = vmatmul.bf16.gmra.mxu0 %v171
    %v211 = vpop.f32.mrf.mxu0
    %v212 = vadd.f32 %v73, %v211
    %v213 = vpop.f32.mrf.mxu0
    %v214 = vadd.f32 %v73, %v213
    %215 = vmatmul.bf16.gmra.mxu0 %v174
    %v216 = vpop.f32.mrf.mxu0
    %v217 = vadd.f32 %v73, %v216
    %v218 = vpop.f32.mrf.mxu0
    %v219 = vadd.f32 %v73, %v218
    %220 = vmatmul.bf16.gmra.mxu0 %v177
    %v221 = vpop.f32.mrf.mxu0
    %v222 = vadd.f32 %v73, %v221
    %v223 = vpop.f32.mrf.mxu0
    %v224 = vadd.f32 %v73, %v223
    %225 = vmatmul.bf16.gmra.mxu0 %v180
    %v226 = vpop.f32.mrf.mxu0
    %v227 = vadd.f32 %v73, %v226
    %v228 = vpop.f32.mrf.mxu0
    %v229 = vadd.f32 %v73, %v228
    %230 = vdwg.mxu0
    %231 = vmatpush.bf16.msra.mxu0 0
    %232 = vmatpush.bf16.msra.mxu0 0
    %233 = vmatpush.bf16.msra.mxu0 0
    %234 = vmatpush.bf16.msra.mxu0 0
    %235 = vmatpush.bf16.msra.mxu0 %v148
    %236 = vmatpush.bf16.msra.mxu0 %v146
    %237 = vmatpush.bf16.msra.mxu0 %v144
    %238 = vmatpush.bf16.msra.mxu0 %v142
    %239 = vmatmul.bf16.gmra.mxu0 %v159
    %v240 = vpop.f32.mrf.mxu0
    %v241 = vadd.f32 %v74, %v240
    %v242 = vpop.f32.mrf.mxu0
    %v243 = vadd.f32 %v74, %v242
    %244 = vmatmul.bf16.gmra.mxu0 %v162
    %v245 = vpop.f32.mrf.mxu0
    %v246 = vadd.f32 %v74, %v245
    %v247 = vpop.f32.mrf.mxu0
    %v248 = vadd.f32 %v74, %v247
    %249 = vmatmul.bf16.gmra.mxu0 %v165
    %v250 = vpop.f32.mrf.mxu0
    %v251 = vadd.f32 %v74, %v250
    %v252 = vpop.f32.mrf.mxu0
    %v253 = vadd.f32 %v74, %v252
    %254 = vmatmul.bf16.gmra.mxu0 %v168
    %v255 = vpop.f32.mrf.mxu0
    %v256 = vadd.f32 %v74, %v255
    %v257 = vpop.f32.mrf.mxu0
    %v258 = vadd.f32 %v74, %v257
    %259 = vmatmul.bf16.gmra.mxu0 %v171
    %v260 = vpop.f32.mrf.mxu0
    %v261 = vadd.f32 %v74, %v260
    %v262 = vpop.f32.mrf.mxu0
    %v263 = vadd.f32 %v74, %v262
    %264 = vmatmul.bf16.gmra.mxu0 %v174
    %v265 = vpop.f32.mrf.mxu0
    %v266 = vadd.f32 %v74, %v265
    %v267 = vpop.f32.mrf.mxu0
    %v268 = vadd.f32 %v74, %v267
    %269 = vmatmul.bf16.gmra.mxu0 %v177
    %v270 = vpop.f32.mrf.mxu0
    %v271 = vadd.f32 %v74, %v270
    %v272 = vpop.f32.mrf.mxu0
    %v273 = vadd.f32 %v74, %v272
    %274 = vmatmul.bf16.gmra.mxu0 %v180
    %v275 = vpop.f32.mrf.mxu0
    %v276 = vadd.f32 %v74, %v275
    %v277 = vpop.f32.mrf.mxu0
    %v278 = vadd.f32 %v74, %v277
    %279 = vdwg.mxu0
    %280 = vst [vmem:[#allocation3] sm:$0xff] %v192
    %281 = vst [vmem:[#allocation3 + $0x8] sm:$0xff] %v241
    %282 = vst [vmem:[#allocation3 + $0x10] sm:$0xff] %v194
    %283 = vst [vmem:[#allocation3 + $0x18] sm:$0xff] %v243
    %284 = vst [vmem:[#allocation3 + $0x20] sm:$0xff] %v197
    %285 = vst [vmem:[#allocation3 + $0x28] sm:$0xff] %v246
    %286 = vst [vmem:[#allocation3 + $0x30] sm:$0xff] %v199
    %287 = vst [vmem:[#allocation3 + $0x38] sm:$0xff] %v248
    %288 = vst [vmem:[#allocation3 + $0x40] sm:$0xff] %v202
    %289 = vst [vmem:[#allocation3 + $0x48] sm:$0xff] %v251
    %290 = vst [vmem:[#allocation3 + $0x50] sm:$0xff] %v204
    %291 = vst [vmem:[#allocation3 + $0x58] sm:$0xff] %v253
    %292 = vst [vmem:[#allocation3 + $0x60] sm:$0xff] %v207
    %293 = vst [vmem:[#allocation3 + $0x68] sm:$0xff] %v256
    %294 = vst [vmem:[#allocation3 + $0x70] sm:$0xff] %v209
    %295 = vst [vmem:[#allocation3 + $0x78] sm:$0xff] %v258
    %296 = vst [vmem:[#allocation3 + $0x80] sm:$0xff] %v212
    %297 = vst [vmem:[#allocation3 + $0x88] sm:$0xff] %v261
    %298 = vst [vmem:[#allocation3 + $0x90] sm:$0xff] %v214
    %299 = vst [vmem:[#allocation3 + $0x98] sm:$0xff] %v263
    %300 = vst [vmem:[#allocation3 + $0xa0] sm:$0xff] %v217
    %301 = vst [vmem:[#allocation3 + $0xa8] sm:$0xff] %v266
    %302 = vst [vmem:[#allocation3 + $0xb0] sm:$0xff] %v219
    %303 = vst [vmem:[#allocation3 + $0xb8] sm:$0xff] %v268
    %304 = vst [vmem:[#allocation3 + $0xc0] sm:$0xff] %v222
    %305 = vst [vmem:[#allocation3 + $0xc8] sm:$0xff] %v271
    %306 = vst [vmem:[#allocation3 + $0xd0] sm:$0xff] %v224
    %307 = vst [vmem:[#allocation3 + $0xd8] sm:$0xff] %v273
    %308 = vst [vmem:[#allocation3 + $0xe0] sm:$0xff] %v227
    %309 = vst [vmem:[#allocation3 + $0xe8] sm:$0xff] %v276
    %310 = vst [vmem:[#allocation3 + $0xf0] sm:$0xff] %v229
    %311 = vst [vmem:[#allocation3 + $0xf8] sm:$0xff] %v278
    %v312 = vld [vmem:[#allocation4] sm:$0xff]
    %v313 = vld [vmem:[#allocation4 + $0x8] sm:$0xff]
    %v314 = vld [vmem:[#allocation4 + $0x10] sm:$0xff]
    %v315 = vld [vmem:[#allocation4 + $0x18] sm:$0xff]
    %v316 = vld [vmem:[#allocation4 + $0x20] sm:$0xff]
    %v317 = vld [vmem:[#allocation4 + $0x28] sm:$0xff]
    %v318 = vld [vmem:[#allocation4 + $0x30] sm:$0xff]
    %v319 = vld [vmem:[#allocation4 + $0x38] sm:$0xff]
    %v320 = vld [vmem:[#allocation4 + $0x40] sm:$0xff]
    %v321 = vld [vmem:[#allocation4 + $0x48] sm:$0xff]
    %v322 = vld [vmem:[#allocation4 + $0x50] sm:$0xff]
    %v323 = vld [vmem:[#allocation4 + $0x58] sm:$0xff]
    %v324 = vld [vmem:[#allocation4 + $0x60] sm:$0xff]
    %v325 = vld [vmem:[#allocation4 + $0x68] sm:$0xff]
    %v326 = vld [vmem:[#allocation4 + $0x70] sm:$0xff]
    %v327 = vld [vmem:[#allocation4 + $0x78] sm:$0xff]
    %v328 = vld [vmem:[#allocation2] sm:$0xff]
    %v329 = vld [vmem:[#allocation2 + $0x8] sm:$0xff]
    %s330 = smul.u32 0, 2
    %s331 = smul.addr %s330, 8
    %s332 = scalar_lea.vmem [#allocation3], %s331
    %v333 = vld [vmem:[%s332] sm:$0xff]
    %v334 = vld [vmem:[%s332 + $0x8] sm:$0xff]
    %v335 = vld [vmem:[%s332 + $0x10] sm:$0xff]
    %v336 = vld [vmem:[%s332 + $0x18] sm:$0xff]
    %v337 = vpack.c.bf16 %v329, %v328
    %v354 = vunpack.c.l.b16 %v312
    %v355 = vunpack.c.h.b16 %v312
    %v356 = vunpack.c.l.b16 %v313
    %v357 = vunpack.c.h.b16 %v313
    %v358 = vunpack.c.l.b16 %v314
    %v359 = vunpack.c.h.b16 %v314
    %v360 = vunpack.c.l.b16 %v315
    %v361 = vunpack.c.h.b16 %v315
    %v362 = vunpack.c.l.b16 %v316
    %v363 = vunpack.c.h.b16 %v316
    %v364 = vunpack.c.l.b16 %v317
    %v365 = vunpack.c.h.b16 %v317
    %v366 = vunpack.c.l.b16 %v318
    %v367 = vunpack.c.h.b16 %v318
    %v368 = vunpack.c.l.b16 %v319
    %v369 = vunpack.c.h.b16 %v319
    %v370 = vunpack.c.l.b16 %v320
    %v371 = vunpack.c.h.b16 %v320
    %v372 = vunpack.c.l.b16 %v321
    %v373 = vunpack.c.h.b16 %v321
    %v374 = vunpack.c.l.b16 %v322
    %v375 = vunpack.c.h.b16 %v322
    %v376 = vunpack.c.l.b16 %v323
    %v377 = vunpack.c.h.b16 %v323
    %v378 = vunpack.c.l.b16 %v324
    %v379 = vunpack.c.h.b16 %v324
    %v380 = vunpack.c.l.b16 %v325
    %v381 = vunpack.c.h.b16 %v325
    %v382 = vunpack.c.l.b16 %v326
    %v383 = vunpack.c.h.b16 %v326
    %v384 = vunpack.c.l.b16 %v327
    %v385 = vunpack.c.h.b16 %v327
    %v386 = vpack.c.b16 %v356, %v354
    %v387 = vpack.c.b16 %v357, %v355
    %v388 = vpack.c.b16 %v360, %v358
    %v389 = vpack.c.b16 %v361, %v359
    %v390 = vpack.c.b16 %v364, %v362
    %v391 = vpack.c.b16 %v365, %v363
    %v392 = vpack.c.b16 %v368, %v366
    %v393 = vpack.c.b16 %v369, %v367
    %v394 = vpack.c.b16 %v372, %v370
    %v395 = vpack.c.b16 %v373, %v371
    %v396 = vpack.c.b16 %v376, %v374
    %v397 = vpack.c.b16 %v377, %v375
    %v398 = vpack.c.b16 %v380, %v378
    %v399 = vpack.c.b16 %v381, %v379
    %v400 = vpack.c.b16 %v384, %v382
    %v401 = vpack.c.b16 %v385, %v383
    %418 = vmatpush.bf16.msra.mxu0 %v400
    %419 = vmatpush.bf16.msra.mxu0 %v398
    %420 = vmatpush.bf16.msra.mxu0 %v396
    %421 = vmatpush.bf16.msra.mxu0 %v394
    %422 = vmatpush.bf16.msra.mxu0 %v392
    %423 = vmatpush.bf16.msra.mxu0 %v390
    %424 = vmatpush.bf16.msra.mxu0 %v388
    %425 = vmatpush.bf16.msra.mxu0 %v386
    %426 = vmatmul.bf16.gmra.mxu0 %v337
    %v427 = vpop.f32.mrf.mxu0
    %v428 = vadd.f32 0.0, %v427
    %v429 = vpop.f32.mrf.mxu0
    %v430 = vadd.f32 0.0, %v429
    %431 = vdwg.mxu0
    %432 = vmatpush.bf16.msra.mxu0 %v401
    %433 = vmatpush.bf16.msra.mxu0 %v399
    %434 = vmatpush.bf16.msra.mxu0 %v397
    %435 = vmatpush.bf16.msra.mxu0 %v395
    %436 = vmatpush.bf16.msra.mxu0 %v393
    %437 = vmatpush.bf16.msra.mxu0 %v391
    %438 = vmatpush.bf16.msra.mxu0 %v389
    %439 = vmatpush.bf16.msra.mxu0 %v387
    %440 = vmatmul.bf16.gmra.mxu0 %v337
    %v441 = vpop.f32.mrf.mxu0
    %v442 = vadd.f32 0.0, %v441
    %v443 = vpop.f32.mrf.mxu0
    %v444 = vadd.f32 0.0, %v443
    %445 = vdwg.mxu0
    %v446 = vadd.f32 %v333, %v428
    %v447 = vadd.f32 %v334, %v442
    %v448 = vadd.f32 %v335, %v430
    %v449 = vadd.f32 %v336, %v444
    %450 = vmax.xlane.f32.xlu0 %v447
    %v451 = vpop.xlane.xlu0 %450
    %452 = vmax.xlane.f32.xlu0 %v449
    %v453 = vpop.xlane.xlu0 %452
    %v454 = vsub.f32 %v447, %v451
    %v455 = vsub.f32 %v449, %v453
    %v456 = vmul.f32 %v454, 1.442695
    %v457 = vpow.pop %v456
    %v458 = vmul.f32 %v455, 1.442695
    %v459 = vpow.pop %v458
    %460 = vadd.xlane.f32.xlu0 %v457
    %v461 = vpop.xlane.xlu0 %460
    %462 = vadd.xlane.f32.xlu0 %v459
    %v463 = vpop.xlane.xlu0 %462
    %v464 = vlog2.pop %v461
    %v465 = vmul.f32 %v464, 0.6931472
    %v466 = vlog2.pop %v463
    %v467 = vmul.f32 %v466, 0.6931472
    %v468 = vsub.f32 %v454, %v465
    %v469 = vsub.f32 %v455, %v467
    %470 = vst [vmem:[%s5] sm:$0xff] %v468
    %471 = vst [vmem:[%s5 + $0x8] sm:$0xff] %v469
    %s472 = smul.u32 0, 8
    %p473 = scmp.lt.s32.totalorder %s472, 8
    %s474 = scalar_select %p473, 1, 0
    %v475 = vstv %s474
    %vm476 = vcmp.eq.s32.totalorder %v475, 1
    %v477 = vsel %vm476, %v446, %v328
    %v478 = vsel %vm476, %v448, %v329
    %s479 = smul.u32 2, 2
    %s480 = smul.addr %s479, 8
    %s481 = scalar_lea.vmem [#allocation3], %s480
    %v482 = vld [vmem:[%s481] sm:$0xff]
    %v483 = vld [vmem:[%s481 + $0x8] sm:$0xff]
    %v484 = vld [vmem:[%s481 + $0x10] sm:$0xff]
    %v485 = vld [vmem:[%s481 + $0x18] sm:$0xff]
    %v486 = vpack.c.bf16 %v478, %v477
    %487 = vmatpush.bf16.msra.mxu0 %v400
    %488 = vmatpush.bf16.msra.mxu0 %v398
    %489 = vmatpush.bf16.msra.mxu0 %v396
    %490 = vmatpush.bf16.msra.mxu0 %v394
    %491 = vmatpush.bf16.msra.mxu0 %v392
    %492 = vmatpush.bf16.msra.mxu0 %v390
    %493 = vmatpush.bf16.msra.mxu0 %v388
    %494 = vmatpush.bf16.msra.mxu0 %v386
    %495 = vmatmul.bf16.gmra.mxu0 %v486
    %v496 = vpop.f32.mrf.mxu0
    %v497 = vadd.f32 0.0, %v496
    %v498 = vpop.f32.mrf.mxu0
    %v499 = vadd.f32 0.0, %v498
    %500 = vdwg.mxu0
    %501 = vmatpush.bf16.msra.mxu0 %v401
    %502 = vmatpush.bf16.msra.mxu0 %v399
    %503 = vmatpush.bf16.msra.mxu0 %v397
    %504 = vmatpush.bf16.msra.mxu0 %v395
    %505 = vmatpush.bf16.msra.mxu0 %v393
    %506 = vmatpush.bf16.msra.mxu0 %v391
    %507 = vmatpush.bf16.msra.mxu0 %v389
    %508 = vmatpush.bf16.msra.mxu0 %v387
    %509 = vmatmul.bf16.gmra.mxu0 %v486
    %v510 = vpop.f32.mrf.mxu0
    %v511 = vadd.f32 0.0, %v510
    %v512 = vpop.f32.mrf.mxu0
    %v513 = vadd.f32 0.0, %v512
    %514 = vdwg.mxu0
    %v515 = vadd.f32 %v482, %v497
    %v516 = vadd.f32 %v483, %v511
    %v517 = vadd.f32 %v484, %v499
    %v518 = vadd.f32 %v485, %v513
    %519 = vmax.xlane.f32.xlu0 %v516
    %v520 = vpop.xlane.xlu0 %519
    %521 = vmax.xlane.f32.xlu0 %v518
    %v522 = vpop.xlane.xlu0 %521
    %v523 = vsub.f32 %v516, %v520
    %v524 = vsub.f32 %v518, %v522
    %v525 = vmul.f32 %v523, 1.442695
    %v526 = vpow.pop %v525
    %v527 = vmul.f32 %v524, 1.442695
    %v528 = vpow.pop %v527
    %529 = vadd.xlane.f32.xlu0 %v526
    %v530 = vpop.xlane.xlu0 %529
    %531 = vadd.xlane.f32.xlu0 %v528
    %v532 = vpop.xlane.xlu0 %531
    %v533 = vlog2.pop %v530
    %v534 = vmul.f32 %v533, 0.6931472
    %v535 = vlog2.pop %v532
    %v536 = vmul.f32 %v535, 0.6931472
    %v537 = vsub.f32 %v523, %v534
    %v538 = vsub.f32 %v524, %v536
    %s539 = scalar_lea.vmem %s5, 16
    %540 = vst [vmem:[%s539] sm:$0xff] %v537
    %541 = vst [vmem:[%s539 + $0x8] sm:$0xff] %v538
    %s542 = sadd.s32 %s472, 1
    %p543 = scmp.lt.s32.totalorder %s542, 8
    %s544 = scalar_select %p543, 1, 0
    %v545 = vstv %s544
    %vm546 = vcmp.eq.s32.totalorder %v545, 1
    %v547 = vsel %vm546, %v515, %v477
    %v548 = vsel %vm546, %v517, %v478
    %s549 = smul.u32 4, 2
    %s550 = smul.addr %s549, 8
    %s551 = scalar_lea.vmem [#allocation3], %s550
    %v552 = vld [vmem:[%s551] sm:$0xff]
    %v553 = vld [vmem:[%s551 + $0x8] sm:$0xff]
    %v554 = vld [vmem:[%s551 + $0x10] sm:$0xff]
    %v555 = vld [vmem:[%s551 + $0x18] sm:$0xff]
    %v556 = vpack.c.bf16 %v548, %v547
    %557 = vmatpush.bf16.msra.mxu0 %v400
    %558 = vmatpush.bf16.msra.mxu0 %v398
    %559 = vmatpush.bf16.msra.mxu0 %v396
    %560 = vmatpush.bf16.msra.mxu0 %v394
    %561 = vmatpush.bf16.msra.mxu0 %v392
    %562 = vmatpush.bf16.msra.mxu0 %v390
    %563 = vmatpush.bf16.msra.mxu0 %v388
    %564 = vmatpush.bf16.msra.mxu0 %v386
    %565 = vmatmul.bf16.gmra.mxu0 %v556
    %v566 = vpop.f32.mrf.mxu0
    %v567 = vadd.f32 0.0, %v566
    %v568 = vpop.f32.mrf.mxu0
    %v569 = vadd.f32 0.0, %v568
    %570 = vdwg.mxu0
    %571 = vmatpush.bf16.msra.mxu0 %v401
    %572 = vmatpush.bf16.msra.mxu0 %v399
    %573 = vmatpush.bf16.msra.mxu0 %v397
    %574 = vmatpush.bf16.msra.mxu0 %v395
    %575 = vmatpush.bf16.msra.mxu0 %v393
    %576 = vmatpush.bf16.msra.mxu0 %v391
    %577 = vmatpush.bf16.msra.mxu0 %v389
    %578 = vmatpush.bf16.msra.mxu0 %v387
    %579 = vmatmul.bf16.gmra.mxu0 %v556
    %v580 = vpop.f32.mrf.mxu0
    %v581 = vadd.f32 0.0, %v580
    %v582 = vpop.f32.mrf.mxu0
    %v583 = vadd.f32 0.0, %v582
    %584 = vdwg.mxu0
    %v585 = vadd.f32 %v552, %v567
    %v586 = vadd.f32 %v553, %v581
    %v587 = vadd.f32 %v554, %v569
    %v588 = vadd.f32 %v555, %v583
    %589 = vmax.xlane.f32.xlu0 %v586
    %v590 = vpop.xlane.xlu0 %589
    %591 = vmax.xlane.f32.xlu0 %v588
    %v592 = vpop.xlane.xlu0 %591
    %v593 = vsub.f32 %v586, %v590
    %v594 = vsub.f32 %v588, %v592
    %v595 = vmul.f32 %v593, 1.442695
    %v596 = vpow.pop %v595
    %v597 = vmul.f32 %v594, 1.442695
    %v598 = vpow.pop %v597
    %599 = vadd.xlane.f32.xlu0 %v596
    %v600 = vpop.xlane.xlu0 %599
    %601 = vadd.xlane.f32.xlu0 %v598
    %v602 = vpop.xlane.xlu0 %601
    %v603 = vlog2.pop %v600
    %v604 = vmul.f32 %v603, 0.6931472
    %v605 = vlog2.pop %v602
    %v606 = vmul.f32 %v605, 0.6931472
    %v607 = vsub.f32 %v593, %v604
    %v608 = vsub.f32 %v594, %v606
    %s609 = scalar_lea.vmem %s5, 32
    %610 = vst [vmem:[%s609] sm:$0xff] %v607
    %611 = vst [vmem:[%s609 + $0x8] sm:$0xff] %v608
    %s612 = sadd.s32 %s472, 2
    %p613 = scmp.lt.s32.totalorder %s612, 8
    %s614 = scalar_select %p613, 1, 0
    %v615 = vstv %s614
    %vm616 = vcmp.eq.s32.totalorder %v615, 1
    %v617 = vsel %vm616, %v585, %v547
    %v618 = vsel %vm616, %v587, %v548
    %s619 = smul.u32 6, 2
    %s620 = smul.addr %s619, 8
    %s621 = scalar_lea.vmem [#allocation3], %s620
    %v622 = vld [vmem:[%s621] sm:$0xff]
    %v623 = vld [vmem:[%s621 + $0x8] sm:$0xff]
    %v624 = vld [vmem:[%s621 + $0x10] sm:$0xff]
    %v625 = vld [vmem:[%s621 + $0x18] sm:$0xff]
    %v626 = vpack.c.bf16 %v618, %v617
    %627 = vmatpush.bf16.msra.mxu0 %v400
    %628 = vmatpush.bf16.msra.mxu0 %v398
    %629 = vmatpush.bf16.msra.mxu0 %v396
    %630 = vmatpush.bf16.msra.mxu0 %v394
    %631 = vmatpush.bf16.msra.mxu0 %v392
    %632 = vmatpush.bf16.msra.mxu0 %v390
    %633 = vmatpush.bf16.msra.mxu0 %v388
    %634 = vmatpush.bf16.msra.mxu0 %v386
    %635 = vmatmul.bf16.gmra.mxu0 %v626
    %v636 = vpop.f32.mrf.mxu0
    %v637 = vadd.f32 0.0, %v636
    %v638 = vpop.f32.mrf.mxu0
    %v639 = vadd.f32 0.0, %v638
    %640 = vdwg.mxu0
    %641 = vmatpush.bf16.msra.mxu0 %v401
    %642 = vmatpush.bf16.msra.mxu0 %v399
    %643 = vmatpush.bf16.msra.mxu0 %v397
    %644 = vmatpush.bf16.msra.mxu0 %v395
    %645 = vmatpush.bf16.msra.mxu0 %v393
    %646 = vmatpush.bf16.msra.mxu0 %v391
    %647 = vmatpush.bf16.msra.mxu0 %v389
    %648 = vmatpush.bf16.msra.mxu0 %v387
    %649 = vmatmul.bf16.gmra.mxu0 %v626
    %v650 = vpop.f32.mrf.mxu0
    %v651 = vadd.f32 0.0, %v650
    %v652 = vpop.f32.mrf.mxu0
    %v653 = vadd.f32 0.0, %v652
    %654 = vdwg.mxu0
    %v655 = vadd.f32 %v622, %v637
    %v656 = vadd.f32 %v623, %v651
    %v657 = vadd.f32 %v624, %v639
    %v658 = vadd.f32 %v625, %v653
    %659 = vmax.xlane.f32.xlu0 %v656
    %v660 = vpop.xlane.xlu0 %659
    %661 = vmax.xlane.f32.xlu0 %v658
    %v662 = vpop.xlane.xlu0 %661
    %v663 = vsub.f32 %v656, %v660
    %v664 = vsub.f32 %v658, %v662
    %v665 = vmul.f32 %v663, 1.442695
    %v666 = vpow.pop %v665
    %v667 = vmul.f32 %v664, 1.442695
    %v668 = vpow.pop %v667
    %669 = vadd.xlane.f32.xlu0 %v666
    %v670 = vpop.xlane.xlu0 %669
    %671 = vadd.xlane.f32.xlu0 %v668
    %v672 = vpop.xlane.xlu0 %671
    %v673 = vlog2.pop %v670
    %v674 = vmul.f32 %v673, 0.6931472
    %v675 = vlog2.pop %v672
    %v676 = vmul.f32 %v675, 0.6931472
    %v677 = vsub.f32 %v663, %v674
    %v678 = vsub.f32 %v664, %v676
    %s679 = scalar_lea.vmem %s5, 48
    %680 = vst [vmem:[%s679] sm:$0xff] %v677
    %681 = vst [vmem:[%s679 + $0x8] sm:$0xff] %v678
    %s682 = sadd.s32 %s472, 3
    %p683 = scmp.lt.s32.totalorder %s682, 8
    %s684 = scalar_select %p683, 1, 0
    %v685 = vstv %s684
    %vm686 = vcmp.eq.s32.totalorder %v685, 1
    %v687 = vsel %vm686, %v655, %v617
    %v688 = vsel %vm686, %v657, %v618
    %s689 = smul.u32 8, 2
    %s690 = smul.addr %s689, 8
    %s691 = scalar_lea.vmem [#allocation3], %s690
    %v692 = vld [vmem:[%s691] sm:$0xff]
    %v693 = vld [vmem:[%s691 + $0x8] sm:$0xff]
    %v694 = vld [vmem:[%s691 + $0x10] sm:$0xff]
    %v695 = vld [vmem:[%s691 + $0x18] sm:$0xff]
    %v696 = vpack.c.bf16 %v688, %v687
    %697 = vmatpush.bf16.msra.mxu0 %v400
    %698 = vmatpush.bf16.msra.mxu0 %v398
    %699 = vmatpush.bf16.msra.mxu0 %v396
    %700 = vmatpush.bf16.msra.mxu0 %v394
    %701 = vmatpush.bf16.msra.mxu0 %v392
    %702 = vmatpush.bf16.msra.mxu0 %v390
    %703 = vmatpush.bf16.msra.mxu0 %v388
    %704 = vmatpush.bf16.msra.mxu0 %v386
    %705 = vmatmul.bf16.gmra.mxu0 %v696
    %v706 = vpop.f32.mrf.mxu0
    %v707 = vadd.f32 0.0, %v706
    %v708 = vpop.f32.mrf.mxu0
    %v709 = vadd.f32 0.0, %v708
    %710 = vdwg.mxu0
    %711 = vmatpush.bf16.msra.mxu0 %v401
    %712 = vmatpush.bf16.msra.mxu0 %v399
    %713 = vmatpush.bf16.msra.mxu0 %v397
    %714 = vmatpush.bf16.msra.mxu0 %v395
    %715 = vmatpush.bf16.msra.mxu0 %v393
    %716 = vmatpush.bf16.msra.mxu0 %v391
    %717 = vmatpush.bf16.msra.mxu0 %v389
    %718 = vmatpush.bf16.msra.mxu0 %v387
    %719 = vmatmul.bf16.gmra.mxu0 %v696
    %v720 = vpop.f32.mrf.mxu0
    %v721 = vadd.f32 0.0, %v720
    %v722 = vpop.f32.mrf.mxu0
    %v723 = vadd.f32 0.0, %v722
    %724 = vdwg.mxu0
    %v725 = vadd.f32 %v692, %v707
    %v726 = vadd.f32 %v693, %v721
    %v727 = vadd.f32 %v694, %v709
    %v728 = vadd.f32 %v695, %v723
    %729 = vmax.xlane.f32.xlu0 %v726
    %v730 = vpop.xlane.xlu0 %729
    %731 = vmax.xlane.f32.xlu0 %v728
    %v732 = vpop.xlane.xlu0 %731
    %v733 = vsub.f32 %v726, %v730
    %v734 = vsub.f32 %v728, %v732
    %v735 = vmul.f32 %v733, 1.442695
    %v736 = vpow.pop %v735
    %v737 = vmul.f32 %v734, 1.442695
    %v738 = vpow.pop %v737
    %739 = vadd.xlane.f32.xlu0 %v736
    %v740 = vpop.xlane.xlu0 %739
    %741 = vadd.xlane.f32.xlu0 %v738
    %v742 = vpop.xlane.xlu0 %741
    %v743 = vlog2.pop %v740
    %v744 = vmul.f32 %v743, 0.6931472
    %v745 = vlog2.pop %v742
    %v746 = vmul.f32 %v745, 0.6931472
    %v747 = vsub.f32 %v733, %v744
    %v748 = vsub.f32 %v734, %v746
    %s749 = scalar_lea.vmem %s5, 64
    %750 = vst [vmem:[%s749] sm:$0xff] %v747
    %751 = vst [vmem:[%s749 + $0x8] sm:$0xff] %v748
    %s752 = sadd.s32 %s472, 4
    %p753 = scmp.lt.s32.totalorder %s752, 8
    %s754 = scalar_select %p753, 1, 0
    %v755 = vstv %s754
    %vm756 = vcmp.eq.s32.totalorder %v755, 1
    %v757 = vsel %vm756, %v725, %v687
    %v758 = vsel %vm756, %v727, %v688
    %s759 = smul.u32 10, 2
    %s760 = smul.addr %s759, 8
    %s761 = scalar_lea.vmem [#allocation3], %s760
    %v762 = vld [vmem:[%s761] sm:$0xff]
    %v763 = vld [vmem:[%s761 + $0x8] sm:$0xff]
    %v764 = vld [vmem:[%s761 + $0x10] sm:$0xff]
    %v765 = vld [vmem:[%s761 + $0x18] sm:$0xff]
    %v766 = vpack.c.bf16 %v758, %v757
    %767 = vmatpush.bf16.msra.mxu0 %v400
    %768 = vmatpush.bf16.msra.mxu0 %v398
    %769 = vmatpush.bf16.msra.mxu0 %v396
    %770 = vmatpush.bf16.msra.mxu0 %v394
    %771 = vmatpush.bf16.msra.mxu0 %v392
    %772 = vmatpush.bf16.msra.mxu0 %v390
    %773 = vmatpush.bf16.msra.mxu0 %v388
    %774 = vmatpush.bf16.msra.mxu0 %v386
    %775 = vmatmul.bf16.gmra.mxu0 %v766
    %v776 = vpop.f32.mrf.mxu0
    %v777 = vadd.f32 0.0, %v776
    %v778 = vpop.f32.mrf.mxu0
    %v779 = vadd.f32 0.0, %v778
    %780 = vdwg.mxu0
    %781 = vmatpush.bf16.msra.mxu0 %v401
    %782 = vmatpush.bf16.msra.mxu0 %v399
    %783 = vmatpush.bf16.msra.mxu0 %v397
    %784 = vmatpush.bf16.msra.mxu0 %v395
    %785 = vmatpush.bf16.msra.mxu0 %v393
    %786 = vmatpush.bf16.msra.mxu0 %v391
    %787 = vmatpush.bf16.msra.mxu0 %v389
    %788 = vmatpush.bf16.msra.mxu0 %v387
    %789 = vmatmul.bf16.gmra.mxu0 %v766
    %v790 = vpop.f32.mrf.mxu0
    %v791 = vadd.f32 0.0, %v790
    %v792 = vpop.f32.mrf.mxu0
    %v793 = vadd.f32 0.0, %v792
    %794 = vdwg.mxu0
    %v795 = vadd.f32 %v762, %v777
    %v796 = vadd.f32 %v763, %v791
    %v797 = vadd.f32 %v764, %v779
    %v798 = vadd.f32 %v765, %v793
    %799 = vmax.xlane.f32.xlu0 %v796
    %v800 = vpop.xlane.xlu0 %799
    %801 = vmax.xlane.f32.xlu0 %v798
    %v802 = vpop.xlane.xlu0 %801
    %v803 = vsub.f32 %v796, %v800
    %v804 = vsub.f32 %v798, %v802
    %v805 = vmul.f32 %v803, 1.442695
    %v806 = vpow.pop %v805
    %v807 = vmul.f32 %v804, 1.442695
    %v808 = vpow.pop %v807
    %809 = vadd.xlane.f32.xlu0 %v806
    %v810 = vpop.xlane.xlu0 %809
    %811 = vadd.xlane.f32.xlu0 %v808
    %v812 = vpop.xlane.xlu0 %811
    %v813 = vlog2.pop %v810
    %v814 = vmul.f32 %v813, 0.6931472
    %v815 = vlog2.pop %v812
    %v816 = vmul.f32 %v815, 0.6931472
    %v817 = vsub.f32 %v803, %v814
    %v818 = vsub.f32 %v804, %v816
    %s819 = scalar_lea.vmem %s5, 80
    %820 = vst [vmem:[%s819] sm:$0xff] %v817
    %821 = vst [vmem:[%s819 + $0x8] sm:$0xff] %v818
    %s822 = sadd.s32 %s472, 5
    %p823 = scmp.lt.s32.totalorder %s822, 8
    %s824 = scalar_select %p823, 1, 0
    %v825 = vstv %s824
    %vm826 = vcmp.eq.s32.totalorder %v825, 1
    %v827 = vsel %vm826, %v795, %v757
    %v828 = vsel %vm826, %v797, %v758
    %s829 = smul.u32 12, 2
    %s830 = smul.addr %s829, 8
    %s831 = scalar_lea.vmem [#allocation3], %s830
    %v832 = vld [vmem:[%s831] sm:$0xff]
    %v833 = vld [vmem:[%s831 + $0x8] sm:$0xff]
    %v834 = vld [vmem:[%s831 + $0x10] sm:$0xff]
    %v835 = vld [vmem:[%s831 + $0x18] sm:$0xff]
    %v836 = vpack.c.bf16 %v828, %v827
    %837 = vmatpush.bf16.msra.mxu0 %v400
    %838 = vmatpush.bf16.msra.mxu0 %v398
    %839 = vmatpush.bf16.msra.mxu0 %v396
    %840 = vmatpush.bf16.msra.mxu0 %v394
    %841 = vmatpush.bf16.msra.mxu0 %v392
    %842 = vmatpush.bf16.msra.mxu0 %v390
    %843 = vmatpush.bf16.msra.mxu0 %v388
    %844 = vmatpush.bf16.msra.mxu0 %v386
    %845 = vmatmul.bf16.gmra.mxu0 %v836
    %v846 = vpop.f32.mrf.mxu0
    %v847 = vadd.f32 0.0, %v846
    %v848 = vpop.f32.mrf.mxu0
    %v849 = vadd.f32 0.0, %v848
    %850 = vdwg.mxu0
    %851 = vmatpush.bf16.msra.mxu0 %v401
    %852 = vmatpush.bf16.msra.mxu0 %v399
    %853 = vmatpush.bf16.msra.mxu0 %v397
    %854 = vmatpush.bf16.msra.mxu0 %v395
    %855 = vmatpush.bf16.msra.mxu0 %v393
    %856 = vmatpush.bf16.msra.mxu0 %v391
    %857 = vmatpush.bf16.msra.mxu0 %v389
    %858 = vmatpush.bf16.msra.mxu0 %v387
    %859 = vmatmul.bf16.gmra.mxu0 %v836
    %v860 = vpop.f32.mrf.mxu0
    %v861 = vadd.f32 0.0, %v860
    %v862 = vpop.f32.mrf.mxu0
    %v863 = vadd.f32 0.0, %v862
    %864 = vdwg.mxu0
    %v865 = vadd.f32 %v832, %v847
    %v866 = vadd.f32 %v833, %v861
    %v867 = vadd.f32 %v834, %v849
    %v868 = vadd.f32 %v835, %v863
    %869 = vmax.xlane.f32.xlu0 %v866
    %v870 = vpop.xlane.xlu0 %869
    %871 = vmax.xlane.f32.xlu0 %v868
    %v872 = vpop.xlane.xlu0 %871
    %v873 = vsub.f32 %v866, %v870
    %v874 = vsub.f32 %v868, %v872
    %v875 = vmul.f32 %v873, 1.442695
    %v876 = vpow.pop %v875
    %v877 = vmul.f32 %v874, 1.442695
    %v878 = vpow.pop %v877
    %879 = vadd.xlane.f32.xlu0 %v876
    %v880 = vpop.xlane.xlu0 %879
    %881 = vadd.xlane.f32.xlu0 %v878
    %v882 = vpop.xlane.xlu0 %881
    %v883 = vlog2.pop %v880
    %v884 = vmul.f32 %v883, 0.6931472
    %v885 = vlog2.pop %v882
    %v886 = vmul.f32 %v885, 0.6931472
    %v887 = vsub.f32 %v873, %v884
    %v888 = vsub.f32 %v874, %v886
    %s889 = scalar_lea.vmem %s5, 96
    %890 = vst [vmem:[%s889] sm:$0xff] %v887
    %891 = vst [vmem:[%s889 + $0x8] sm:$0xff] %v888
    %s892 = sadd.s32 %s472, 6
    %p893 = scmp.lt.s32.totalorder %s892, 8
    %s894 = scalar_select %p893, 1, 0
    %v895 = vstv %s894
    %vm896 = vcmp.eq.s32.totalorder %v895, 1
    %v897 = vsel %vm896, %v865, %v827
    %v898 = vsel %vm896, %v867, %v828
    %s899 = smul.u32 14, 2
    %s900 = smul.addr %s899, 8
    %s901 = scalar_lea.vmem [#allocation3], %s900
    %v902 = vld [vmem:[%s901] sm:$0xff]
    %v903 = vld [vmem:[%s901 + $0x8] sm:$0xff]
    %v904 = vld [vmem:[%s901 + $0x10] sm:$0xff]
    %v905 = vld [vmem:[%s901 + $0x18] sm:$0xff]
    %v906 = vpack.c.bf16 %v898, %v897
    %907 = vmatpush.bf16.msra.mxu0 %v400
    %908 = vmatpush.bf16.msra.mxu0 %v398
    %909 = vmatpush.bf16.msra.mxu0 %v396
    %910 = vmatpush.bf16.msra.mxu0 %v394
    %911 = vmatpush.bf16.msra.mxu0 %v392
    %912 = vmatpush.bf16.msra.mxu0 %v390
    %913 = vmatpush.bf16.msra.mxu0 %v388
    %914 = vmatpush.bf16.msra.mxu0 %v386
    %915 = vmatmul.bf16.gmra.mxu0 %v906
    %v916 = vpop.f32.mrf.mxu0
    %v917 = vadd.f32 0.0, %v916
    %v918 = vpop.f32.mrf.mxu0
    %v919 = vadd.f32 0.0, %v918
    %920 = vdwg.mxu0
    %921 = vmatpush.bf16.msra.mxu0 %v401
    %922 = vmatpush.bf16.msra.mxu0 %v399
    %923 = vmatpush.bf16.msra.mxu0 %v397
    %924 = vmatpush.bf16.msra.mxu0 %v395
    %925 = vmatpush.bf16.msra.mxu0 %v393
    %926 = vmatpush.bf16.msra.mxu0 %v391
    %927 = vmatpush.bf16.msra.mxu0 %v389
    %928 = vmatpush.bf16.msra.mxu0 %v387
    %929 = vmatmul.bf16.gmra.mxu0 %v906
    %v930 = vpop.f32.mrf.mxu0
    %v931 = vadd.f32 0.0, %v930
    %v932 = vpop.f32.mrf.mxu0
    %v933 = vadd.f32 0.0, %v932
    %934 = vdwg.mxu0
    %v935 = vadd.f32 %v902, %v917
    %v936 = vadd.f32 %v903, %v931
    %v937 = vadd.f32 %v904, %v919
    %v938 = vadd.f32 %v905, %v933
    %939 = vmax.xlane.f32.xlu0 %v936
    %v940 = vpop.xlane.xlu0 %939
    %941 = vmax.xlane.f32.xlu0 %v938
    %v942 = vpop.xlane.xlu0 %941
    %v943 = vsub.f32 %v936, %v940
    %v944 = vsub.f32 %v938, %v942
    %v945 = vmul.f32 %v943, 1.442695
    %v946 = vpow.pop %v945
    %v947 = vmul.f32 %v944, 1.442695
    %v948 = vpow.pop %v947
    %949 = vadd.xlane.f32.xlu0 %v946
    %v950 = vpop.xlane.xlu0 %949
    %951 = vadd.xlane.f32.xlu0 %v948
    %v952 = vpop.xlane.xlu0 %951
    %v953 = vlog2.pop %v950
    %v954 = vmul.f32 %v953, 0.6931472
    %v955 = vlog2.pop %v952
    %v956 = vmul.f32 %v955, 0.6931472
    %v957 = vsub.f32 %v943, %v954
    %v958 = vsub.f32 %v944, %v956
    %s959 = scalar_lea.vmem %s5, 112
    %960 = vst [vmem:[%s959] sm:$0xff] %v957
    %961 = vst [vmem:[%s959 + $0x8] sm:$0xff] %v958
    %s962 = sadd.s32 %s472, 7
    %p963 = scmp.lt.s32.totalorder %s962, 8
    %s964 = scalar_select %p963, 1, 0
    %v965 = vstv %s964
    %vm966 = vcmp.eq.s32.totalorder %v965, 1
    %v967 = vsel %vm966, %v935, %v897
    %v968 = vsel %vm966, %v937, %v898
    %969 = vst [vmem:[#allocation2] sm:$0xff] %v967
    %970 = vst [vmem:[#allocation2 + $0x8] sm:$0xff] %v968
    %971 = vst [vmem:[%s6] sm:$0xff] %v967
    %972 = vst [vmem:[%s6 + $0x8] sm:$0xff] %v968
    // Predicated region
    $region30: #{rnn_sequence.1} parent=1 // pred_check
      _
    $region31: #{rnn_sequence.1} parent=1 // pred_check_branch
      %974 = sbr.rel (0) target = $region33
    $region32: #{rnn_sequence.1} parent=1 // pred_region
      _
    $region33: #{rnn_sequence.1} parent=1 // pred_fallthru
      _
    // Predicated region
    $region34: #{rnn_sequence.1} parent=1 // pred_check
      _
    $region35: #{rnn_sequence.1} parent=1 // pred_check_branch
      %976 = sbr.rel (0) target = $region37
    $region36: #{rnn_sequence.1} parent=1 // pred_region
      _
    $region37: #{rnn_sequence.1} parent=1 // pred_fallthru
      _
    // Predicated region
    $region38: #{rnn_sequence.1} parent=1 // pred_check
      _
    $region39: #{rnn_sequence.1} parent=1 // pred_check_branch
      %978 = sbr.rel (0) target = $region41
    $region40: #{rnn_sequence.1} parent=1 // pred_region
      _
    $region41: #{rnn_sequence.1} parent=1 // pred_fallthru
      _
    // Predicated region
    $region42: #{rnn_sequence.1} parent=1 // pred_check
      _
    $region43: #{rnn_sequence.1} parent=1 // pred_check_branch
      %980 = sbr.rel (0) target = $region45
    $region44: #{rnn_sequence.1} parent=1 // pred_region
      _
    $region45: #{rnn_sequence.1} parent=1 // pred_fallthru
      _
    %981 = vsyncpa [#allocation5], 1

</llo_original>
